<compile_context>
chip_gen: v5e
topology: v5e:2x2
jax: 0.10.0
libtpu: 0.0.40
codegen_flags: <defaults>
</compile_context>

<pallas_src>
import math

import jax
import jax.numpy as jnp
from jax.experimental import pallas as pl
from jax.experimental.pallas import tpu as pltpu

# ----------------------------- config (small) -------------------------------
B = 2            # batch
T = 8            # seq_len
C = 32           # n_embd
H = 4            # n_head
HD = C // H      # head_dim
N = B * T        # flattened token count


# --------------------------- quantization helpers ---------------------------
def _act_quant_parts(x):
    """BitActivationQuant, factored: integer part (|q| <= 127, exactly
    representable in bf16) and the per-row dequant scale (absmax / 127)."""
    am = jnp.maximum(jnp.max(jnp.abs(x), axis=-1, keepdims=True), 1e-5)
    q = jnp.clip(jnp.round(x * (127.0 / am)), -128.0, 127.0)
    return q, am * (1.0 / 127.0)


def _act_quant(x):
    """Fake-quantized (dequantized) activations."""
    q, s = _act_quant_parts(x)
    return q * s


def _weight_quant_parts(w):
    """BitLinear 1.58-bit ternary fake-quant, factored into the ternary values
    and the scalar dequant multiplier.  Done once, outside the kernel."""
    scale = 1.0 / jnp.clip(jnp.mean(jnp.abs(w)), 1e-5, None)
    w_tern = jnp.clip(jnp.round(w * scale), -1.0, 1.0)
    return w_tern, 1.0 / scale


def _weight_quant(w):
    w_tern, m = _weight_quant_parts(w)
    return w_tern * m            # identical to w_tern / scale for ternary vals


# ------------------------------- Pallas kernel -------------------------------
def gain_cell_attn_kernel(x_ref, wqkv_ref, wscale_ref, bqkv_ref,
                          wp_ref, bp_ref, o_ref):
    # x_ref:      (N, C)    f32   flattened (B*T, C) input
    # wqkv_ref:   (C, 3C)   bf16  ternary {-1,0,+1} [Wq^T | Wk^T | Wv^T]
    # wscale_ref: (1, 3C)   f32   per-output-column weight dequant scale
    # bqkv_ref:   (1, 3C)   f32   [bq | bk | bv]
    # wp_ref:     (C, C)    f32   dequantized proj weight, (in, out)
    # bp_ref:     (1, C)    f32
    # o_ref:      (N, C)    f32
    inv_sqrt_d = 1.0 / math.sqrt(HD)

    # --- input activation quant, kept factored (int part + per-row scale) [R1]
    x_int, s_x = _act_quant_parts(x_ref[...])                     # (N,C),(N,1)

    # --- fused QKV projection: ONE (N,C)@(C,3C) bf16 matmul, f32 accumulate.
    # Operands are exact in bf16 (ints <= 127, ternary weights); the per-row /
    # per-column scales are constant along the contraction and are applied to
    # the accumulator afterwards (exactly equivalent math).        [R1, R4-R6]
    acc = jnp.dot(x_int.astype(jnp.bfloat16), wqkv_ref[...],
                  preferred_element_type=jnp.float32)              # (N, 3C)
    qkv = acc * s_x * wscale_ref[...] + bqkv_ref[...]              # lane-dense

    # --- batch back as a real dim (free leading-axis split, T == 8 sublanes)
    qkv3 = qkv.reshape(B, T, 3 * C)                                # [R2]

    # --- per-head attention: static unrolled loop (H=4) of leading-batch
    # (B,T,T) matmuls.  Same MXU work as a (B*H)-batched einsum, no in-kernel
    # 4-D transposes, no cross-batch score entries, no mask.      [R2, R8]
    ys = []
    for h in range(H):
        q_int, s_q = _act_quant_parts(qkv3[:, :, h * HD:(h + 1) * HD])
        k_int, s_k = _act_quant_parts(qkv3[:, :, C + h * HD:C + (h + 1) * HD])
        v = _act_quant(qkv3[:, :, 2 * C + h * HD:2 * C + (h + 1) * HD])

        # q·k^T on exact bf16 integer operands; per-row scales (constant along
        # the head_dim contraction) applied to the f32 accumulator.
        s_int = jnp.einsum('bqd,bkd->bqk',
                           q_int.astype(jnp.bfloat16),
                           k_int.astype(jnp.bfloat16),
                           preferred_element_type=jnp.float32)     # (B, T, T)
        att = s_int * (s_q * inv_sqrt_d) * jnp.swapaxes(s_k, 1, 2)
        att = jax.nn.softmax(att, axis=-1)
        att = _act_quant(att)                        # quant over the key axis

        # att·v stays f32: the per-key v scale varies along the contraction,
        # so it cannot be factored out exactly.
        y_h = jnp.einsum('bqk,bkd->bqd', att, v,
                         preferred_element_type=jnp.float32)       # (B, T, HD)
        ys.append(_act_quant(y_h))                   # quant over head_dim

    # --- head re-merge folded into ONE lane-dense (N,C)@(C,C) projection  [R3]
    y = jnp.concatenate(ys, axis=-1).reshape(N, C)
    out = jnp.dot(y, wp_ref[...], preferred_element_type=jnp.float32) + bp_ref[...]
    out = _act_quant(out)                            # final activation quant
    o_ref[...] = out.astype(o_ref.dtype)             # dropout = identity (eval)


# --------------------------------- wrapper -----------------------------------
@jax.jit
def gain_cell_attention(x, wq, wk, wv, wp, bq, bk, bv, bp):
    """x: (B, T, C) float32.  Weights are PyTorch-style (out, in); biases (C,)."""
    # Parameter prep (done once in real usage): ternary weight quant, transpose
    # to (in, out) and concatenate q|k|v along the output axis so the kernel's
    # QKV projection is a single lane-dense matmul.                       [R1]
    def tern_t(w):
        w_tern, m = _weight_quant_parts(w)
        return w_tern.T, m                      # (C_in, C_out) ternary, scale

    (wq_t, mq), (wk_t, mk), (wv_t, mv) = tern_t(wq), tern_t(wk), tern_t(wv)
    wqkv = jnp.concatenate([wq_t, wk_t, wv_t], axis=1).astype(jnp.bfloat16)
    wscale = jnp.concatenate(
        [jnp.broadcast_to(m, (C,)) for m in (mq, mk, mv)]).reshape(1, 3 * C)
    bqkv = jnp.concatenate([bq, bk, bv]).reshape(1, 3 * C)
    wp_t = _weight_quant(wp).T                  # (C, C) dequantized, (in, out)
    bp2 = bp.reshape(1, C)

    vmem = pl.BlockSpec(memory_space=pltpu.MemorySpace.VMEM)
    out_flat = pl.pallas_call(
        gain_cell_attn_kernel,
        out_shape=jax.ShapeDtypeStruct((N, C), jnp.float32),
        in_specs=[vmem] * 6,
        out_specs=vmem,
    )(x.reshape(N, C), wqkv, wscale, bqkv, wp_t, bp2)
    return out_flat.reshape(B, T, C)


# ------------------------------ pure-JAX reference ---------------------------
def reference(x, wq, wk, wv, wp, bq, bk, bv, bp):
    # precision=HIGHEST so the reference matmuls are true f32 (not default bf16
    # passes) and the comparison is not absorbing a reference-side artifact.
    HI = jax.lax.Precision.HIGHEST
    xq = _act_quant(x)                                            # (B, T, C)

    def lin(xx, w, b):
        return jnp.einsum("btc,oc->bto", xx, _weight_quant(w),
                          precision=HI,
                          preferred_element_type=jnp.float32) + b

    q = lin(xq, wq, bq).reshape(B, T, H, HD).transpose(0, 2, 1, 3)
    k = lin(xq, wk, bk).reshape(B, T, H, HD).transpose(0, 2, 1, 3)
    v = lin(xq, wv, bv).reshape(B, T, H, HD).transpose(0, 2, 1, 3)
    q, k, v = _act_quant(q), _act_quant(k), _act_quant(v)
    att = jnp.einsum("bhqd,bhkd->bhqk", q, k, precision=HI,
                     preferred_element_type=jnp.float32) / math.sqrt(HD)
    att = jax.nn.softmax(att, axis=-1)
    att = _act_quant(att)
    y = jnp.einsum("bhqk,bhkd->bhqd", att, v, precision=HI,
                   preferred_element_type=jnp.float32)
    y = _act_quant(y)
    y = y.transpose(0, 2, 1, 3).reshape(B, T, C)
    y = jnp.einsum("btc,oc->bto", y, _weight_quant(wp), precision=HI,
                   preferred_element_type=jnp.float32) + bp
    return _act_quant(y)


# ----------------------------------- main ------------------------------------
if __name__ == "__main__":
    key = jax.random.PRNGKey(0)
    ks = jax.random.split(key, 9)
    x = jax.random.normal(ks[0], (B, T, C), jnp.float32)
    wq = 0.02 * jax.random.normal(ks[1], (C, C), jnp.float32)
    wk = 0.02 * jax.random.normal(ks[2], (C, C), jnp.float32)
    wv = 0.02 * jax.random.normal(ks[3], (C, C), jnp.float32)
    wp = 0.02 * jax.random.normal(ks[4], (C, C), jnp.float32)
    bq = 0.01 * jax.random.normal(ks[5], (C,), jnp.float32)
    bk = 0.01 * jax.random.normal(ks[6], (C,), jnp.float32)
    bv = 0.01 * jax.random.normal(ks[7], (C,), jnp.float32)
    bp = 0.01 * jax.random.normal(ks[8], (C,), jnp.float32)

    out = gain_cell_attention(x, wq, wk, wv, wp, bq, bk, bv, bp)
    out = jax.block_until_ready(out)
    assert out.shape == (B, T, C)

    ref = reference(x, wq, wk, wv, wp, bq, bk, bv, bp)
    err_max = float(jnp.max(jnp.abs(out - ref)))
    err_mean = float(jnp.mean(jnp.abs(out - ref)))
    # Outputs are fake-quantized (snapped to bins of width row_absmax/127).
    # The kernel applies quant scales to the f32 accumulators (factored form)
    # while the reference dequantizes before each matmul, so intermediate
    # roundings differ by ~ulps; at worst that flips a value by about one
    # quantization bin.  A structural/layout bug would produce errors on the
    # order of the outputs themselves (>> one bin), so this still catches
    # real mistakes; the tight mean-error check catches any broad drift.
    bin_sz = float(jnp.max(jnp.abs(ref))) / 127.0
    assert err_max <= 1.5 * bin_sz + 1e-4, (err_max, bin_sz)
    assert err_mean <= 5e-5, err_mean
    print("KERNEL_OK")
</pallas_src>

<mosaic_0001>
module attributes {stable_mosaic.version = 11 : i64} {
  func.func @gain_cell_attn_kernel(%arg0: memref<16x32xf32, #tpu.memory_space<vmem>>, %arg1: memref<32x96xbf16, #tpu.memory_space<vmem>>, %arg2: memref<1x96xf32, #tpu.memory_space<vmem>>, %arg3: memref<1x96xf32, #tpu.memory_space<vmem>>, %arg4: memref<32x32xf32, #tpu.memory_space<vmem>>, %arg5: memref<1x32xf32, #tpu.memory_space<vmem>>, %arg6: memref<16x32xf32, #tpu.memory_space<vmem>>) attributes {dimension_semantics = [], scalar_prefetch = 0 : i64, scratch_operands = 0 : i64, tpu.core_type = #tpu.core_type<tc>} {
    %c0 = arith.constant 0 : index
    %c0_0 = arith.constant 0 : index
    %0 = vector.load %arg0[%c0, %c0_0] : memref<16x32xf32, #tpu.memory_space<vmem>>, vector<16x32xf32>
    %1 = math.absf %0 : vector<16x32xf32>
    %cst = arith.constant dense<0xFF800000> : vector<16xf32>
    %2 = vector.multi_reduction <maximumf>, %1, %cst [1] : vector<16x32xf32> to vector<16xf32>
    %3 = vector.shape_cast %2 : vector<16xf32> to vector<16x1xf32>
    %cst_1 = arith.constant 9.99999974E-6 : f32
    %4 = vector.broadcast %cst_1 : f32 to vector<16x1xf32>
    %5 = arith.maximumf %3, %4 : vector<16x1xf32>
    %cst_2 = arith.constant 1.270000e+02 : f32
    %6 = vector.broadcast %cst_2 : f32 to vector<16x1xf32>
    %7 = arith.divf %6, %5 : vector<16x1xf32>
    %8 = vector.broadcast %7 : vector<16x1xf32> to vector<16x32xf32>
    %9 = arith.mulf %0, %8 : vector<16x32xf32>
    %10 = math.roundeven %9 : vector<16x32xf32>
    %cst_3 = arith.constant -1.280000e+02 : f32
    %cst_4 = arith.constant 1.270000e+02 : f32
    %11 = vector.broadcast %cst_3 : f32 to vector<16x32xf32>
    %12 = arith.maximumf %11, %10 : vector<16x32xf32>
    %13 = vector.broadcast %cst_4 : f32 to vector<16x32xf32>
    %14 = arith.minimumf %13, %12 : vector<16x32xf32>
    %cst_5 = arith.constant 0.00787401571 : f32
    %15 = vector.broadcast %cst_5 : f32 to vector<16x1xf32>
    %16 = arith.mulf %5, %15 : vector<16x1xf32>
    %17 = arith.truncf %14 : vector<16x32xf32> to vector<16x32xbf16>
    %c0_6 = arith.constant 0 : index
    %c0_7 = arith.constant 0 : index
    %18 = vector.load %arg1[%c0_6, %c0_7] : memref<32x96xbf16, #tpu.memory_space<vmem>>, vector<32x96xbf16>
    %cst_8 = arith.constant dense<0.000000e+00> : vector<16x96xf32>
    %19 = tpu.matmul %17, %18, %cst_8 {dimension_numbers = #tpu.dot_dimension_numbers<[1], [0], [0], [1], [0, 0, 1, 1], [], []>} : vector<16x32xbf16>, vector<32x96xbf16>, vector<16x96xf32> -> vector<16x96xf32>
    %20 = vector.broadcast %16 : vector<16x1xf32> to vector<16x96xf32>
    %21 = arith.mulf %19, %20 : vector<16x96xf32>
    %c0_9 = arith.constant 0 : index
    %c0_10 = arith.constant 0 : index
    %22 = vector.load %arg2[%c0_9, %c0_10] : memref<1x96xf32, #tpu.memory_space<vmem>>, vector<1x96xf32>
    %23 = vector.broadcast %22 : vector<1x96xf32> to vector<16x96xf32>
    %24 = arith.mulf %21, %23 : vector<16x96xf32>
    %c0_11 = arith.constant 0 : index
    %c0_12 = arith.constant 0 : index
    %25 = vector.load %arg3[%c0_11, %c0_12] : memref<1x96xf32, #tpu.memory_space<vmem>>, vector<1x96xf32>
    %26 = vector.broadcast %25 : vector<1x96xf32> to vector<16x96xf32>
    %27 = arith.addf %24, %26 : vector<16x96xf32>
    %28 = vector.shape_cast %27 : vector<16x96xf32> to vector<2x8x96xf32>
    %29 = vector.extract_strided_slice %28 {offsets = [0, 0, 0], sizes = [2, 8, 8], strides = [1, 1, 1]} : vector<2x8x96xf32> to vector<2x8x8xf32>
    %30 = math.absf %29 : vector<2x8x8xf32>
    %cst_13 = arith.constant dense<0xFF800000> : vector<2x8xf32>
    %31 = vector.multi_reduction <maximumf>, %30, %cst_13 [2] : vector<2x8x8xf32> to vector<2x8xf32>
    %32 = vector.shape_cast %31 : vector<2x8xf32> to vector<2x8x1xf32>
    %cst_14 = arith.constant 9.99999974E-6 : f32
    %33 = vector.broadcast %cst_14 : f32 to vector<2x8x1xf32>
    %34 = arith.maximumf %32, %33 : vector<2x8x1xf32>
    %cst_15 = arith.constant 1.270000e+02 : f32
    %35 = vector.broadcast %cst_15 : f32 to vector<2x8x1xf32>
    %36 = arith.divf %35, %34 : vector<2x8x1xf32>
    %37 = vector.broadcast %36 : vector<2x8x1xf32> to vector<2x8x8xf32>
    %38 = arith.mulf %29, %37 : vector<2x8x8xf32>
    %39 = math.roundeven %38 : vector<2x8x8xf32>
    %cst_16 = arith.constant -1.280000e+02 : f32
    %cst_17 = arith.constant 1.270000e+02 : f32
    %40 = vector.broadcast %cst_16 : f32 to vector<2x8x8xf32>
    %41 = arith.maximumf %40, %39 : vector<2x8x8xf32>
    %42 = vector.broadcast %cst_17 : f32 to vector<2x8x8xf32>
    %43 = arith.minimumf %42, %41 : vector<2x8x8xf32>
    %cst_18 = arith.constant 0.00787401571 : f32
    %44 = vector.broadcast %cst_18 : f32 to vector<2x8x1xf32>
    %45 = arith.mulf %34, %44 : vector<2x8x1xf32>
    %46 = vector.extract_strided_slice %28 {offsets = [0, 0, 32], sizes = [2, 8, 8], strides = [1, 1, 1]} : vector<2x8x96xf32> to vector<2x8x8xf32>
    %47 = math.absf %46 : vector<2x8x8xf32>
    %cst_19 = arith.constant dense<0xFF800000> : vector<2x8xf32>
    %48 = vector.multi_reduction <maximumf>, %47, %cst_19 [2] : vector<2x8x8xf32> to vector<2x8xf32>
    %49 = vector.shape_cast %48 : vector<2x8xf32> to vector<2x8x1xf32>
    %cst_20 = arith.constant 9.99999974E-6 : f32
    %50 = vector.broadcast %cst_20 : f32 to vector<2x8x1xf32>
    %51 = arith.maximumf %49, %50 : vector<2x8x1xf32>
    %cst_21 = arith.constant 1.270000e+02 : f32
    %52 = vector.broadcast %cst_21 : f32 to vector<2x8x1xf32>
    %53 = arith.divf %52, %51 : vector<2x8x1xf32>
    %54 = vector.broadcast %53 : vector<2x8x1xf32> to vector<2x8x8xf32>
    %55 = arith.mulf %46, %54 : vector<2x8x8xf32>
    %56 = math.roundeven %55 : vector<2x8x8xf32>
    %cst_22 = arith.constant -1.280000e+02 : f32
    %cst_23 = arith.constant 1.270000e+02 : f32
    %57 = vector.broadcast %cst_22 : f32 to vector<2x8x8xf32>
    %58 = arith.maximumf %57, %56 : vector<2x8x8xf32>
    %59 = vector.broadcast %cst_23 : f32 to vector<2x8x8xf32>
    %60 = arith.minimumf %59, %58 : vector<2x8x8xf32>
    %cst_24 = arith.constant 0.00787401571 : f32
    %61 = vector.broadcast %cst_24 : f32 to vector<2x8x1xf32>
    %62 = arith.mulf %51, %61 : vector<2x8x1xf32>
    %63 = vector.extract_strided_slice %28 {offsets = [0, 0, 64], sizes = [2, 8, 8], strides = [1, 1, 1]} : vector<2x8x96xf32> to vector<2x8x8xf32>
    %64 = math.absf %63 : vector<2x8x8xf32>
    %cst_25 = arith.constant dense<0xFF800000> : vector<2x8xf32>
    %65 = vector.multi_reduction <maximumf>, %64, %cst_25 [2] : vector<2x8x8xf32> to vector<2x8xf32>
    %66 = vector.shape_cast %65 : vector<2x8xf32> to vector<2x8x1xf32>
    %cst_26 = arith.constant 9.99999974E-6 : f32
    %67 = vector.broadcast %cst_26 : f32 to vector<2x8x1xf32>
    %68 = arith.maximumf %66, %67 : vector<2x8x1xf32>
    %cst_27 = arith.constant 1.270000e+02 : f32
    %69 = vector.broadcast %cst_27 : f32 to vector<2x8x1xf32>
    %70 = arith.divf %69, %68 : vector<2x8x1xf32>
    %71 = vector.broadcast %70 : vector<2x8x1xf32> to vector<2x8x8xf32>
    %72 = arith.mulf %63, %71 : vector<2x8x8xf32>
    %73 = math.roundeven %72 : vector<2x8x8xf32>
    %cst_28 = arith.constant -1.280000e+02 : f32
    %cst_29 = arith.constant 1.270000e+02 : f32
    %74 = vector.broadcast %cst_28 : f32 to vector<2x8x8xf32>
    %75 = arith.maximumf %74, %73 : vector<2x8x8xf32>
    %76 = vector.broadcast %cst_29 : f32 to vector<2x8x8xf32>
    %77 = arith.minimumf %76, %75 : vector<2x8x8xf32>
    %cst_30 = arith.constant 0.00787401571 : f32
    %78 = vector.broadcast %cst_30 : f32 to vector<2x8x1xf32>
    %79 = arith.mulf %68, %78 : vector<2x8x1xf32>
    %80 = vector.broadcast %79 : vector<2x8x1xf32> to vector<2x8x8xf32>
    %81 = arith.mulf %77, %80 : vector<2x8x8xf32>
    %82 = arith.truncf %43 : vector<2x8x8xf32> to vector<2x8x8xbf16>
    %83 = arith.truncf %60 : vector<2x8x8xf32> to vector<2x8x8xbf16>
    "tpu.trace_start"() <{level = 10 : i32, message = "bqd,bkd->bqk"}> : () -> ()
    %cst_31 = arith.constant dense<0.000000e+00> : vector<2x8x8xf32>
    %84 = tpu.matmul %82, %83, %cst_31 {dimension_numbers = #tpu.dot_dimension_numbers<[2], [2], [1], [1], [0, 0, 0, 1, 1, 1], [0], [0]>} : vector<2x8x8xbf16>, vector<2x8x8xbf16>, vector<2x8x8xf32> -> vector<2x8x8xf32>
    "tpu.trace_stop"() : () -> ()
    %cst_32 = arith.constant 0.353553385 : f32
    %85 = vector.broadcast %cst_32 : f32 to vector<2x8x1xf32>
    %86 = arith.mulf %45, %85 : vector<2x8x1xf32>
    %87 = vector.broadcast %86 : vector<2x8x1xf32> to vector<2x8x8xf32>
    %88 = arith.mulf %84, %87 : vector<2x8x8xf32>
    %89 = tpu.transpose %62, [0, 2, 1] : vector<2x8x1xf32> -> vector<2x1x8xf32>
    %90 = vector.broadcast %89 : vector<2x1x8xf32> to vector<2x8x8xf32>
    %91 = arith.mulf %88, %90 : vector<2x8x8xf32>
    %cst_33 = arith.constant dense<0xFF800000> : vector<2x8xf32>
    %92 = vector.multi_reduction <maximumf>, %91, %cst_33 [2] : vector<2x8x8xf32> to vector<2x8xf32>
    %cst_34 = arith.constant 0xFF800000 : f32
    %93 = vector.broadcast %cst_34 : f32 to vector<2x8xf32>
    %94 = arith.maximumf %93, %92 : vector<2x8xf32>
    %95 = vector.shape_cast %94 : vector<2x8xf32> to vector<2x8x1xf32>
    %96 = vector.broadcast %95 : vector<2x8x1xf32> to vector<2x8x8xf32>
    %97 = arith.subf %91, %96 : vector<2x8x8xf32>
    %98 = math.exp %97 : vector<2x8x8xf32>
    %cst_35 = arith.constant dense<0.000000e+00> : vector<2x8xf32>
    %99 = vector.multi_reduction <add>, %98, %cst_35 [2] : vector<2x8x8xf32> to vector<2x8xf32>
    %100 = vector.shape_cast %99 : vector<2x8xf32> to vector<2x8x1xf32>
    %101 = vector.broadcast %100 : vector<2x8x1xf32> to vector<2x8x8xf32>
    %102 = arith.divf %98, %101 : vector<2x8x8xf32>
    %103 = math.absf %102 : vector<2x8x8xf32>
    %cst_36 = arith.constant dense<0xFF800000> : vector<2x8xf32>
    %104 = vector.multi_reduction <maximumf>, %103, %cst_36 [2] : vector<2x8x8xf32> to vector<2x8xf32>
    %105 = vector.shape_cast %104 : vector<2x8xf32> to vector<2x8x1xf32>
    %cst_37 = arith.constant 9.99999974E-6 : f32
    %106 = vector.broadcast %cst_37 : f32 to vector<2x8x1xf32>
    %107 = arith.maximumf %105, %106 : vector<2x8x1xf32>
    %cst_38 = arith.constant 1.270000e+02 : f32
    %108 = vector.broadcast %cst_38 : f32 to vector<2x8x1xf32>
    %109 = arith.divf %108, %107 : vector<2x8x1xf32>
    %110 = vector.broadcast %109 : vector<2x8x1xf32> to vector<2x8x8xf32>
    %111 = arith.mulf %102, %110 : vector<2x8x8xf32>
    %112 = math.roundeven %111 : vector<2x8x8xf32>
    %cst_39 = arith.constant -1.280000e+02 : f32
    %cst_40 = arith.constant 1.270000e+02 : f32
    %113 = vector.broadcast %cst_39 : f32 to vector<2x8x8xf32>
    %114 = arith.maximumf %113, %112 : vector<2x8x8xf32>
    %115 = vector.broadcast %cst_40 : f32 to vector<2x8x8xf32>
    %116 = arith.minimumf %115, %114 : vector<2x8x8xf32>
    %cst_41 = arith.constant 0.00787401571 : f32
    %117 = vector.broadcast %cst_41 : f32 to vector<2x8x1xf32>
    %118 = arith.mulf %107, %117 : vector<2x8x1xf32>
    %119 = vector.broadcast %118 : vector<2x8x1xf32> to vector<2x8x8xf32>
    %120 = arith.mulf %116, %119 : vector<2x8x8xf32>
    "tpu.trace_start"() <{level = 10 : i32, message = "bqk,bkd->bqd"}> : () -> ()
    %cst_42 = arith.constant dense<0.000000e+00> : vector<2x8x8xf32>
    %121 = tpu.matmul %120, %81, %cst_42 {dimension_numbers = #tpu.dot_dimension_numbers<[2], [1], [1], [2], [0, 0, 0, 1, 1, 2], [0], [0]>} : vector<2x8x8xf32>, vector<2x8x8xf32>, vector<2x8x8xf32> -> vector<2x8x8xf32>
    "tpu.trace_stop"() : () -> ()
    %122 = math.absf %121 : vector<2x8x8xf32>
    %cst_43 = arith.constant dense<0xFF800000> : vector<2x8xf32>
    %123 = vector.multi_reduction <maximumf>, %122, %cst_43 [2] : vector<2x8x8xf32> to vector<2x8xf32>
    %124 = vector.shape_cast %123 : vector<2x8xf32> to vector<2x8x1xf32>
    %cst_44 = arith.constant 9.99999974E-6 : f32
    %125 = vector.broadcast %cst_44 : f32 to vector<2x8x1xf32>
    %126 = arith.maximumf %124, %125 : vector<2x8x1xf32>
    %cst_45 = arith.constant 1.270000e+02 : f32
    %127 = vector.broadcast %cst_45 : f32 to vector<2x8x1xf32>
    %128 = arith.divf %127, %126 : vector<2x8x1xf32>
    %129 = vector.broadcast %128 : vector<2x8x1xf32> to vector<2x8x8xf32>
    %130 = arith.mulf %121, %129 : vector<2x8x8xf32>
    %131 = math.roundeven %130 : vector<2x8x8xf32>
    %cst_46 = arith.constant -1.280000e+02 : f32
    %cst_47 = arith.constant 1.270000e+02 : f32
    %132 = vector.broadcast %cst_46 : f32 to vector<2x8x8xf32>
    %133 = arith.maximumf %132, %131 : vector<2x8x8xf32>
    %134 = vector.broadcast %cst_47 : f32 to vector<2x8x8xf32>
    %135 = arith.minimumf %134, %133 : vector<2x8x8xf32>
    %cst_48 = arith.constant 0.00787401571 : f32
    %136 = vector.broadcast %cst_48 : f32 to vector<2x8x1xf32>
    %137 = arith.mulf %126, %136 : vector<2x8x1xf32>
    %138 = vector.broadcast %137 : vector<2x8x1xf32> to vector<2x8x8xf32>
    %139 = arith.mulf %135, %138 : vector<2x8x8xf32>
    %140 = vector.extract_strided_slice %28 {offsets = [0, 0, 8], sizes = [2, 8, 8], strides = [1, 1, 1]} : vector<2x8x96xf32> to vector<2x8x8xf32>
    %141 = math.absf %140 : vector<2x8x8xf32>
    %cst_49 = arith.constant dense<0xFF800000> : vector<2x8xf32>
    %142 = vector.multi_reduction <maximumf>, %141, %cst_49 [2] : vector<2x8x8xf32> to vector<2x8xf32>
    %143 = vector.shape_cast %142 : vector<2x8xf32> to vector<2x8x1xf32>
    %cst_50 = arith.constant 9.99999974E-6 : f32
    %144 = vector.broadcast %cst_50 : f32 to vector<2x8x1xf32>
    %145 = arith.maximumf %143, %144 : vector<2x8x1xf32>
    %cst_51 = arith.constant 1.270000e+02 : f32
    %146 = vector.broadcast %cst_51 : f32 to vector<2x8x1xf32>
    %147 = arith.divf %146, %145 : vector<2x8x1xf32>
    %148 = vector.broadcast %147 : vector<2x8x1xf32> to vector<2x8x8xf32>
    %149 = arith.mulf %140, %148 : vector<2x8x8xf32>
    %150 = math.roundeven %149 : vector<2x8x8xf32>
    %cst_52 = arith.constant -1.280000e+02 : f32
    %cst_53 = arith.constant 1.270000e+02 : f32
    %151 = vector.broadcast %cst_52 : f32 to vector<2x8x8xf32>
    %152 = arith.maximumf %151, %150 : vector<2x8x8xf32>
    %153 = vector.broadcast %cst_53 : f32 to vector<2x8x8xf32>
    %154 = arith.minimumf %153, %152 : vector<2x8x8xf32>
    %cst_54 = arith.constant 0.00787401571 : f32
    %155 = vector.broadcast %cst_54 : f32 to vector<2x8x1xf32>
    %156 = arith.mulf %145, %155 : vector<2x8x1xf32>
    %157 = vector.extract_strided_slice %28 {offsets = [0, 0, 40], sizes = [2, 8, 8], strides = [1, 1, 1]} : vector<2x8x96xf32> to vector<2x8x8xf32>
    %158 = math.absf %157 : vector<2x8x8xf32>
    %cst_55 = arith.constant dense<0xFF800000> : vector<2x8xf32>
    %159 = vector.multi_reduction <maximumf>, %158, %cst_55 [2] : vector<2x8x8xf32> to vector<2x8xf32>
    %160 = vector.shape_cast %159 : vector<2x8xf32> to vector<2x8x1xf32>
    %cst_56 = arith.constant 9.99999974E-6 : f32
    %161 = vector.broadcast %cst_56 : f32 to vector<2x8x1xf32>
    %162 = arith.maximumf %160, %161 : vector<2x8x1xf32>
    %cst_57 = arith.constant 1.270000e+02 : f32
    %163 = vector.broadcast %cst_57 : f32 to vector<2x8x1xf32>
    %164 = arith.divf %163, %162 : vector<2x8x1xf32>
    %165 = vector.broadcast %164 : vector<2x8x1xf32> to vector<2x8x8xf32>
    %166 = arith.mulf %157, %165 : vector<2x8x8xf32>
    %167 = math.roundeven %166 : vector<2x8x8xf32>
    %cst_58 = arith.constant -1.280000e+02 : f32
    %cst_59 = arith.constant 1.270000e+02 : f32
    %168 = vector.broadcast %cst_58 : f32 to vector<2x8x8xf32>
    %169 = arith.maximumf %168, %167 : vector<2x8x8xf32>
    %170 = vector.broadcast %cst_59 : f32 to vector<2x8x8xf32>
    %171 = arith.minimumf %170, %169 : vector<2x8x8xf32>
    %cst_60 = arith.constant 0.00787401571 : f32
    %172 = vector.broadcast %cst_60 : f32 to vector<2x8x1xf32>
    %173 = arith.mulf %162, %172 : vector<2x8x1xf32>
    %174 = vector.extract_strided_slice %28 {offsets = [0, 0, 72], sizes = [2, 8, 8], strides = [1, 1, 1]} : vector<2x8x96xf32> to vector<2x8x8xf32>
    %175 = math.absf %174 : vector<2x8x8xf32>
    %cst_61 = arith.constant dense<0xFF800000> : vector<2x8xf32>
    %176 = vector.multi_reduction <maximumf>, %175, %cst_61 [2] : vector<2x8x8xf32> to vector<2x8xf32>
    %177 = vector.shape_cast %176 : vector<2x8xf32> to vector<2x8x1xf32>
    %cst_62 = arith.constant 9.99999974E-6 : f32
    %178 = vector.broadcast %cst_62 : f32 to vector<2x8x1xf32>
    %179 = arith.maximumf %177, %178 : vector<2x8x1xf32>
    %cst_63 = arith.constant 1.270000e+02 : f32
    %180 = vector.broadcast %cst_63 : f32 to vector<2x8x1xf32>
    %181 = arith.divf %180, %179 : vector<2x8x1xf32>
    %182 = vector.broadcast %181 : vector<2x8x1xf32> to vector<2x8x8xf32>
    %183 = arith.mulf %174, %182 : vector<2x8x8xf32>
    %184 = math.roundeven %183 : vector<2x8x8xf32>
    %cst_64 = arith.constant -1.280000e+02 : f32
    %cst_65 = arith.constant 1.270000e+02 : f32
    %185 = vector.broadcast %cst_64 : f32 to vector<2x8x8xf32>
    %186 = arith.maximumf %185, %184 : vector<2x8x8xf32>
    %187 = vector.broadcast %cst_65 : f32 to vector<2x8x8xf32>
    %188 = arith.minimumf %187, %186 : vector<2x8x8xf32>
    %cst_66 = arith.constant 0.00787401571 : f32
    %189 = vector.broadcast %cst_66 : f32 to vector<2x8x1xf32>
    %190 = arith.mulf %179, %189 : vector<2x8x1xf32>
    %191 = vector.broadcast %190 : vector<2x8x1xf32> to vector<2x8x8xf32>
    %192 = arith.mulf %188, %191 : vector<2x8x8xf32>
    %193 = arith.truncf %154 : vector<2x8x8xf32> to vector<2x8x8xbf16>
    %194 = arith.truncf %171 : vector<2x8x8xf32> to vector<2x8x8xbf16>
    "tpu.trace_start"() <{level = 10 : i32, message = "bqd,bkd->bqk"}> : () -> ()
    %cst_67 = arith.constant dense<0.000000e+00> : vector<2x8x8xf32>
    %195 = tpu.matmul %193, %194, %cst_67 {dimension_numbers = #tpu.dot_dimension_numbers<[2], [2], [1], [1], [0, 0, 0, 1, 1, 1], [0], [0]>} : vector<2x8x8xbf16>, vector<2x8x8xbf16>, vector<2x8x8xf32> -> vector<2x8x8xf32>
    "tpu.trace_stop"() : () -> ()
    %cst_68 = arith.constant 0.353553385 : f32
    %196 = vector.broadcast %cst_68 : f32 to vector<2x8x1xf32>
    %197 = arith.mulf %156, %196 : vector<2x8x1xf32>
    %198 = vector.broadcast %197 : vector<2x8x1xf32> to vector<2x8x8xf32>
    %199 = arith.mulf %195, %198 : vector<2x8x8xf32>
    %200 = tpu.transpose %173, [0, 2, 1] : vector<2x8x1xf32> -> vector<2x1x8xf32>
    %201 = vector.broadcast %200 : vector<2x1x8xf32> to vector<2x8x8xf32>
    %202 = arith.mulf %199, %201 : vector<2x8x8xf32>
    %cst_69 = arith.constant dense<0xFF800000> : vector<2x8xf32>
    %203 = vector.multi_reduction <maximumf>, %202, %cst_69 [2] : vector<2x8x8xf32> to vector<2x8xf32>
    %cst_70 = arith.constant 0xFF800000 : f32
    %204 = vector.broadcast %cst_70 : f32 to vector<2x8xf32>
    %205 = arith.maximumf %204, %203 : vector<2x8xf32>
    %206 = vector.shape_cast %205 : vector<2x8xf32> to vector<2x8x1xf32>
    %207 = vector.broadcast %206 : vector<2x8x1xf32> to vector<2x8x8xf32>
    %208 = arith.subf %202, %207 : vector<2x8x8xf32>
    %209 = math.exp %208 : vector<2x8x8xf32>
    %cst_71 = arith.constant dense<0.000000e+00> : vector<2x8xf32>
    %210 = vector.multi_reduction <add>, %209, %cst_71 [2] : vector<2x8x8xf32> to vector<2x8xf32>
    %211 = vector.shape_cast %210 : vector<2x8xf32> to vector<2x8x1xf32>
    %212 = vector.broadcast %211 : vector<2x8x1xf32> to vector<2x8x8xf32>
    %213 = arith.divf %209, %212 : vector<2x8x8xf32>
    %214 = math.absf %213 : vector<2x8x8xf32>
    %cst_72 = arith.constant dense<0xFF800000> : vector<2x8xf32>
    %215 = vector.multi_reduction <maximumf>, %214, %cst_72 [2] : vector<2x8x8xf32> to vector<2x8xf32>
    %216 = vector.shape_cast %215 : vector<2x8xf32> to vector<2x8x1xf32>
    %cst_73 = arith.constant 9.99999974E-6 : f32
    %217 = vector.broadcast %cst_73 : f32 to vector<2x8x1xf32>
    %218 = arith.maximumf %216, %217 : vector<2x8x1xf32>
    %cst_74 = arith.constant 1.270000e+02 : f32
    %219 = vector.broadcast %cst_74 : f32 to vector<2x8x1xf32>
    %220 = arith.divf %219, %218 : vector<2x8x1xf32>
    %221 = vector.broadcast %220 : vector<2x8x1xf32> to vector<2x8x8xf32>
    %222 = arith.mulf %213, %221 : vector<2x8x8xf32>
    %223 = math.roundeven %222 : vector<2x8x8xf32>
    %cst_75 = arith.constant -1.280000e+02 : f32
    %cst_76 = arith.constant 1.270000e+02 : f32
    %224 = vector.broadcast %cst_75 : f32 to vector<2x8x8xf32>
    %225 = arith.maximumf %224, %223 : vector<2x8x8xf32>
    %226 = vector.broadcast %cst_76 : f32 to vector<2x8x8xf32>
    %227 = arith.minimumf %226, %225 : vector<2x8x8xf32>
    %cst_77 = arith.constant 0.00787401571 : f32
    %228 = vector.broadcast %cst_77 : f32 to vector<2x8x1xf32>
    %229 = arith.mulf %218, %228 : vector<2x8x1xf32>
    %230 = vector.broadcast %229 : vector<2x8x1xf32> to vector<2x8x8xf32>
    %231 = arith.mulf %227, %230 : vector<2x8x8xf32>
    "tpu.trace_start"() <{level = 10 : i32, message = "bqk,bkd->bqd"}> : () -> ()
    %cst_78 = arith.constant dense<0.000000e+00> : vector<2x8x8xf32>
    %232 = tpu.matmul %231, %192, %cst_78 {dimension_numbers = #tpu.dot_dimension_numbers<[2], [1], [1], [2], [0, 0, 0, 1, 1, 2], [0], [0]>} : vector<2x8x8xf32>, vector<2x8x8xf32>, vector<2x8x8xf32> -> vector<2x8x8xf32>
    "tpu.trace_stop"() : () -> ()
    %233 = math.absf %232 : vector<2x8x8xf32>
    %cst_79 = arith.constant dense<0xFF800000> : vector<2x8xf32>
    %234 = vector.multi_reduction <maximumf>, %233, %cst_79 [2] : vector<2x8x8xf32> to vector<2x8xf32>
    %235 = vector.shape_cast %234 : vector<2x8xf32> to vector<2x8x1xf32>
    %cst_80 = arith.constant 9.99999974E-6 : f32
    %236 = vector.broadcast %cst_80 : f32 to vector<2x8x1xf32>
    %237 = arith.maximumf %235, %236 : vector<2x8x1xf32>
    %cst_81 = arith.constant 1.270000e+02 : f32
    %238 = vector.broadcast %cst_81 : f32 to vector<2x8x1xf32>
    %239 = arith.divf %238, %237 : vector<2x8x1xf32>
    %240 = vector.broadcast %239 : vector<2x8x1xf32> to vector<2x8x8xf32>
    %241 = arith.mulf %232, %240 : vector<2x8x8xf32>
    %242 = math.roundeven %241 : vector<2x8x8xf32>
    %cst_82 = arith.constant -1.280000e+02 : f32
    %cst_83 = arith.constant 1.270000e+02 : f32
    %243 = vector.broadcast %cst_82 : f32 to vector<2x8x8xf32>
    %244 = arith.maximumf %243, %242 : vector<2x8x8xf32>
    %245 = vector.broadcast %cst_83 : f32 to vector<2x8x8xf32>
    %246 = arith.minimumf %245, %244 : vector<2x8x8xf32>
    %cst_84 = arith.constant 0.00787401571 : f32
    %247 = vector.broadcast %cst_84 : f32 to vector<2x8x1xf32>
    %248 = arith.mulf %237, %247 : vector<2x8x1xf32>
    %249 = vector.broadcast %248 : vector<2x8x1xf32> to vector<2x8x8xf32>
    %250 = arith.mulf %246, %249 : vector<2x8x8xf32>
    %251 = vector.extract_strided_slice %28 {offsets = [0, 0, 16], sizes = [2, 8, 8], strides = [1, 1, 1]} : vector<2x8x96xf32> to vector<2x8x8xf32>
    %252 = math.absf %251 : vector<2x8x8xf32>
    %cst_85 = arith.constant dense<0xFF800000> : vector<2x8xf32>
    %253 = vector.multi_reduction <maximumf>, %252, %cst_85 [2] : vector<2x8x8xf32> to vector<2x8xf32>
    %254 = vector.shape_cast %253 : vector<2x8xf32> to vector<2x8x1xf32>
    %cst_86 = arith.constant 9.99999974E-6 : f32
    %255 = vector.broadcast %cst_86 : f32 to vector<2x8x1xf32>
    %256 = arith.maximumf %254, %255 : vector<2x8x1xf32>
    %cst_87 = arith.constant 1.270000e+02 : f32
    %257 = vector.broadcast %cst_87 : f32 to vector<2x8x1xf32>
    %258 = arith.divf %257, %256 : vector<2x8x1xf32>
    %259 = vector.broadcast %258 : vector<2x8x1xf32> to vector<2x8x8xf32>
    %260 = arith.mulf %251, %259 : vector<2x8x8xf32>
    %261 = math.roundeven %260 : vector<2x8x8xf32>
    %cst_88 = arith.constant -1.280000e+02 : f32
    %cst_89 = arith.constant 1.270000e+02 : f32
    %262 = vector.broadcast %cst_88 : f32 to vector<2x8x8xf32>
    %263 = arith.maximumf %262, %261 : vector<2x8x8xf32>
    %264 = vector.broadcast %cst_89 : f32 to vector<2x8x8xf32>
    %265 = arith.minimumf %264, %263 : vector<2x8x8xf32>
    %cst_90 = arith.constant 0.00787401571 : f32
    %266 = vector.broadcast %cst_90 : f32 to vector<2x8x1xf32>
    %267 = arith.mulf %256, %266 : vector<2x8x1xf32>
    %268 = vector.extract_strided_slice %28 {offsets = [0, 0, 48], sizes = [2, 8, 8], strides = [1, 1, 1]} : vector<2x8x96xf32> to vector<2x8x8xf32>
    %269 = math.absf %268 : vector<2x8x8xf32>
    %cst_91 = arith.constant dense<0xFF800000> : vector<2x8xf32>
    %270 = vector.multi_reduction <maximumf>, %269, %cst_91 [2] : vector<2x8x8xf32> to vector<2x8xf32>
    %271 = vector.shape_cast %270 : vector<2x8xf32> to vector<2x8x1xf32>
    %cst_92 = arith.constant 9.99999974E-6 : f32
    %272 = vector.broadcast %cst_92 : f32 to vector<2x8x1xf32>
    %273 = arith.maximumf %271, %272 : vector<2x8x1xf32>
    %cst_93 = arith.constant 1.270000e+02 : f32
    %274 = vector.broadcast %cst_93 : f32 to vector<2x8x1xf32>
    %275 = arith.divf %274, %273 : vector<2x8x1xf32>
    %276 = vector.broadcast %275 : vector<2x8x1xf32> to vector<2x8x8xf32>
    %277 = arith.mulf %268, %276 : vector<2x8x8xf32>
    %278 = math.roundeven %277 : vector<2x8x8xf32>
    %cst_94 = arith.constant -1.280000e+02 : f32
    %cst_95 = arith.constant 1.270000e+02 : f32
    %279 = vector.broadcast %cst_94 : f32 to vector<2x8x8xf32>
    %280 = arith.maximumf %279, %278 : vector<2x8x8xf32>
    %281 = vector.broadcast %cst_95 : f32 to vector<2x8x8xf32>
    %282 = arith.minimumf %281, %280 : vector<2x8x8xf32>
    %cst_96 = arith.constant 0.00787401571 : f32
    %283 = vector.broadcast %cst_96 : f32 to vector<2x8x1xf32>
    %284 = arith.mulf %273, %283 : vector<2x8x1xf32>
    %285 = vector.extract_strided_slice %28 {offsets = [0, 0, 80], sizes = [2, 8, 8], strides = [1, 1, 1]} : vector<2x8x96xf32> to vector<2x8x8xf32>
    %286 = math.absf %285 : vector<2x8x8xf32>
    %cst_97 = arith.constant dense<0xFF800000> : vector<2x8xf32>
    %287 = vector.multi_reduction <maximumf>, %286, %cst_97 [2] : vector<2x8x8xf32> to vector<2x8xf32>
    %288 = vector.shape_cast %287 : vector<2x8xf32> to vector<2x8x1xf32>
    %cst_98 = arith.constant 9.99999974E-6 : f32
    %289 = vector.broadcast %cst_98 : f32 to vector<2x8x1xf32>
    %290 = arith.maximumf %288, %289 : vector<2x8x1xf32>
    %cst_99 = arith.constant 1.270000e+02 : f32
    %291 = vector.broadcast %cst_99 : f32 to vector<2x8x1xf32>
    %292 = arith.divf %291, %290 : vector<2x8x1xf32>
    %293 = vector.broadcast %292 : vector<2x8x1xf32> to vector<2x8x8xf32>
    %294 = arith.mulf %285, %293 : vector<2x8x8xf32>
    %295 = math.roundeven %294 : vector<2x8x8xf32>
    %cst_100 = arith.constant -1.280000e+02 : f32
    %cst_101 = arith.constant 1.270000e+02 : f32
    %296 = vector.broadcast %cst_100 : f32 to vector<2x8x8xf32>
    %297 = arith.maximumf %296, %295 : vector<2x8x8xf32>
    %298 = vector.broadcast %cst_101 : f32 to vector<2x8x8xf32>
    %299 = arith.minimumf %298, %297 : vector<2x8x8xf32>
    %cst_102 = arith.constant 0.00787401571 : f32
    %300 = vector.broadcast %cst_102 : f32 to vector<2x8x1xf32>
    %301 = arith.mulf %290, %300 : vector<2x8x1xf32>
    %302 = vector.broadcast %301 : vector<2x8x1xf32> to vector<2x8x8xf32>
    %303 = arith.mulf %299, %302 : vector<2x8x8xf32>
    %304 = arith.truncf %265 : vector<2x8x8xf32> to vector<2x8x8xbf16>
    %305 = arith.truncf %282 : vector<2x8x8xf32> to vector<2x8x8xbf16>
    "tpu.trace_start"() <{level = 10 : i32, message = "bqd,bkd->bqk"}> : () -> ()
    %cst_103 = arith.constant dense<0.000000e+00> : vector<2x8x8xf32>
    %306 = tpu.matmul %304, %305, %cst_103 {dimension_numbers = #tpu.dot_dimension_numbers<[2], [2], [1], [1], [0, 0, 0, 1, 1, 1], [0], [0]>} : vector<2x8x8xbf16>, vector<2x8x8xbf16>, vector<2x8x8xf32> -> vector<2x8x8xf32>
    "tpu.trace_stop"() : () -> ()
    %cst_104 = arith.constant 0.353553385 : f32
    %307 = vector.broadcast %cst_104 : f32 to vector<2x8x1xf32>
    %308 = arith.mulf %267, %307 : vector<2x8x1xf32>
    %309 = vector.broadcast %308 : vector<2x8x1xf32> to vector<2x8x8xf32>
    %310 = arith.mulf %306, %309 : vector<2x8x8xf32>
    %311 = tpu.transpose %284, [0, 2, 1] : vector<2x8x1xf32> -> vector<2x1x8xf32>
    %312 = vector.broadcast %311 : vector<2x1x8xf32> to vector<2x8x8xf32>
    %313 = arith.mulf %310, %312 : vector<2x8x8xf32>
    %cst_105 = arith.constant dense<0xFF800000> : vector<2x8xf32>
    %314 = vector.multi_reduction <maximumf>, %313, %cst_105 [2] : vector<2x8x8xf32> to vector<2x8xf32>
    %cst_106 = arith.constant 0xFF800000 : f32
    %315 = vector.broadcast %cst_106 : f32 to vector<2x8xf32>
    %316 = arith.maximumf %315, %314 : vector<2x8xf32>
    %317 = vector.shape_cast %316 : vector<2x8xf32> to vector<2x8x1xf32>
    %318 = vector.broadcast %317 : vector<2x8x1xf32> to vector<2x8x8xf32>
    %319 = arith.subf %313, %318 : vector<2x8x8xf32>
    %320 = math.exp %319 : vector<2x8x8xf32>
    %cst_107 = arith.constant dense<0.000000e+00> : vector<2x8xf32>
    %321 = vector.multi_reduction <add>, %320, %cst_107 [2] : vector<2x8x8xf32> to vector<2x8xf32>
    %322 = vector.shape_cast %321 : vector<2x8xf32> to vector<2x8x1xf32>
    %323 = vector.broadcast %322 : vector<2x8x1xf32> to vector<2x8x8xf32>
    %324 = arith.divf %320, %323 : vector<2x8x8xf32>
    %325 = math.absf %324 : vector<2x8x8xf32>
    %cst_108 = arith.constant dense<0xFF800000> : vector<2x8xf32>
    %326 = vector.multi_reduction <maximumf>, %325, %cst_108 [2] : vector<2x8x8xf32> to vector<2x8xf32>
    %327 = vector.shape_cast %326 : vector<2x8xf32> to vector<2x8x1xf32>
    %cst_109 = arith.constant 9.99999974E-6 : f32
    %328 = vector.broadcast %cst_109 : f32 to vector<2x8x1xf32>
    %329 = arith.maximumf %327, %328 : vector<2x8x1xf32>
    %cst_110 = arith.constant 1.270000e+02 : f32
    %330 = vector.broadcast %cst_110 : f32 to vector<2x8x1xf32>
    %331 = arith.divf %330, %329 : vector<2x8x1xf32>
    %332 = vector.broadcast %331 : vector<2x8x1xf32> to vector<2x8x8xf32>
    %333 = arith.mulf %324, %332 : vector<2x8x8xf32>
    %334 = math.roundeven %333 : vector<2x8x8xf32>
    %cst_111 = arith.constant -1.280000e+02 : f32
    %cst_112 = arith.constant 1.270000e+02 : f32
    %335 = vector.broadcast %cst_111 : f32 to vector<2x8x8xf32>
    %336 = arith.maximumf %335, %334 : vector<2x8x8xf32>
    %337 = vector.broadcast %cst_112 : f32 to vector<2x8x8xf32>
    %338 = arith.minimumf %337, %336 : vector<2x8x8xf32>
    %cst_113 = arith.constant 0.00787401571 : f32
    %339 = vector.broadcast %cst_113 : f32 to vector<2x8x1xf32>
    %340 = arith.mulf %329, %339 : vector<2x8x1xf32>
    %341 = vector.broadcast %340 : vector<2x8x1xf32> to vector<2x8x8xf32>
    %342 = arith.mulf %338, %341 : vector<2x8x8xf32>
    "tpu.trace_start"() <{level = 10 : i32, message = "bqk,bkd->bqd"}> : () -> ()
    %cst_114 = arith.constant dense<0.000000e+00> : vector<2x8x8xf32>
    %343 = tpu.matmul %342, %303, %cst_114 {dimension_numbers = #tpu.dot_dimension_numbers<[2], [1], [1], [2], [0, 0, 0, 1, 1, 2], [0], [0]>} : vector<2x8x8xf32>, vector<2x8x8xf32>, vector<2x8x8xf32> -> vector<2x8x8xf32>
    "tpu.trace_stop"() : () -> ()
    %344 = math.absf %343 : vector<2x8x8xf32>
    %cst_115 = arith.constant dense<0xFF800000> : vector<2x8xf32>
    %345 = vector.multi_reduction <maximumf>, %344, %cst_115 [2] : vector<2x8x8xf32> to vector<2x8xf32>
    %346 = vector.shape_cast %345 : vector<2x8xf32> to vector<2x8x1xf32>
    %cst_116 = arith.constant 9.99999974E-6 : f32
    %347 = vector.broadcast %cst_116 : f32 to vector<2x8x1xf32>
    %348 = arith.maximumf %346, %347 : vector<2x8x1xf32>
    %cst_117 = arith.constant 1.270000e+02 : f32
    %349 = vector.broadcast %cst_117 : f32 to vector<2x8x1xf32>
    %350 = arith.divf %349, %348 : vector<2x8x1xf32>
    %351 = vector.broadcast %350 : vector<2x8x1xf32> to vector<2x8x8xf32>
    %352 = arith.mulf %343, %351 : vector<2x8x8xf32>
    %353 = math.roundeven %352 : vector<2x8x8xf32>
    %cst_118 = arith.constant -1.280000e+02 : f32
    %cst_119 = arith.constant 1.270000e+02 : f32
    %354 = vector.broadcast %cst_118 : f32 to vector<2x8x8xf32>
    %355 = arith.maximumf %354, %353 : vector<2x8x8xf32>
    %356 = vector.broadcast %cst_119 : f32 to vector<2x8x8xf32>
    %357 = arith.minimumf %356, %355 : vector<2x8x8xf32>
    %cst_120 = arith.constant 0.00787401571 : f32
    %358 = vector.broadcast %cst_120 : f32 to vector<2x8x1xf32>
    %359 = arith.mulf %348, %358 : vector<2x8x1xf32>
    %360 = vector.broadcast %359 : vector<2x8x1xf32> to vector<2x8x8xf32>
    %361 = arith.mulf %357, %360 : vector<2x8x8xf32>
    %362 = vector.extract_strided_slice %28 {offsets = [0, 0, 24], sizes = [2, 8, 8], strides = [1, 1, 1]} : vector<2x8x96xf32> to vector<2x8x8xf32>
    %363 = math.absf %362 : vector<2x8x8xf32>
    %cst_121 = arith.constant dense<0xFF800000> : vector<2x8xf32>
    %364 = vector.multi_reduction <maximumf>, %363, %cst_121 [2] : vector<2x8x8xf32> to vector<2x8xf32>
    %365 = vector.shape_cast %364 : vector<2x8xf32> to vector<2x8x1xf32>
    %cst_122 = arith.constant 9.99999974E-6 : f32
    %366 = vector.broadcast %cst_122 : f32 to vector<2x8x1xf32>
    %367 = arith.maximumf %365, %366 : vector<2x8x1xf32>
    %cst_123 = arith.constant 1.270000e+02 : f32
    %368 = vector.broadcast %cst_123 : f32 to vector<2x8x1xf32>
    %369 = arith.divf %368, %367 : vector<2x8x1xf32>
    %370 = vector.broadcast %369 : vector<2x8x1xf32> to vector<2x8x8xf32>
    %371 = arith.mulf %362, %370 : vector<2x8x8xf32>
    %372 = math.roundeven %371 : vector<2x8x8xf32>
    %cst_124 = arith.constant -1.280000e+02 : f32
    %cst_125 = arith.constant 1.270000e+02 : f32
    %373 = vector.broadcast %cst_124 : f32 to vector<2x8x8xf32>
    %374 = arith.maximumf %373, %372 : vector<2x8x8xf32>
    %375 = vector.broadcast %cst_125 : f32 to vector<2x8x8xf32>
    %376 = arith.minimumf %375, %374 : vector<2x8x8xf32>
    %cst_126 = arith.constant 0.00787401571 : f32
    %377 = vector.broadcast %cst_126 : f32 to vector<2x8x1xf32>
    %378 = arith.mulf %367, %377 : vector<2x8x1xf32>
    %379 = vector.extract_strided_slice %28 {offsets = [0, 0, 56], sizes = [2, 8, 8], strides = [1, 1, 1]} : vector<2x8x96xf32> to vector<2x8x8xf32>
    %380 = math.absf %379 : vector<2x8x8xf32>
    %cst_127 = arith.constant dense<0xFF800000> : vector<2x8xf32>
    %381 = vector.multi_reduction <maximumf>, %380, %cst_127 [2] : vector<2x8x8xf32> to vector<2x8xf32>
    %382 = vector.shape_cast %381 : vector<2x8xf32> to vector<2x8x1xf32>
    %cst_128 = arith.constant 9.99999974E-6 : f32
    %383 = vector.broadcast %cst_128 : f32 to vector<2x8x1xf32>
    %384 = arith.maximumf %382, %383 : vector<2x8x1xf32>
    %cst_129 = arith.constant 1.270000e+02 : f32
    %385 = vector.broadcast %cst_129 : f32 to vector<2x8x1xf32>
    %386 = arith.divf %385, %384 : vector<2x8x1xf32>
    %387 = vector.broadcast %386 : vector<2x8x1xf32> to vector<2x8x8xf32>
    %388 = arith.mulf %379, %387 : vector<2x8x8xf32>
    %389 = math.roundeven %388 : vector<2x8x8xf32>
    %cst_130 = arith.constant -1.280000e+02 : f32
    %cst_131 = arith.constant 1.270000e+02 : f32
    %390 = vector.broadcast %cst_130 : f32 to vector<2x8x8xf32>
    %391 = arith.maximumf %390, %389 : vector<2x8x8xf32>
    %392 = vector.broadcast %cst_131 : f32 to vector<2x8x8xf32>
    %393 = arith.minimumf %392, %391 : vector<2x8x8xf32>
    %cst_132 = arith.constant 0.00787401571 : f32
    %394 = vector.broadcast %cst_132 : f32 to vector<2x8x1xf32>
    %395 = arith.mulf %384, %394 : vector<2x8x1xf32>
    %396 = vector.extract_strided_slice %28 {offsets = [0, 0, 88], sizes = [2, 8, 8], strides = [1, 1, 1]} : vector<2x8x96xf32> to vector<2x8x8xf32>
    %397 = math.absf %396 : vector<2x8x8xf32>
    %cst_133 = arith.constant dense<0xFF800000> : vector<2x8xf32>
    %398 = vector.multi_reduction <maximumf>, %397, %cst_133 [2] : vector<2x8x8xf32> to vector<2x8xf32>
    %399 = vector.shape_cast %398 : vector<2x8xf32> to vector<2x8x1xf32>
    %cst_134 = arith.constant 9.99999974E-6 : f32
    %400 = vector.broadcast %cst_134 : f32 to vector<2x8x1xf32>
    %401 = arith.maximumf %399, %400 : vector<2x8x1xf32>
    %cst_135 = arith.constant 1.270000e+02 : f32
    %402 = vector.broadcast %cst_135 : f32 to vector<2x8x1xf32>
    %403 = arith.divf %402, %401 : vector<2x8x1xf32>
    %404 = vector.broadcast %403 : vector<2x8x1xf32> to vector<2x8x8xf32>
    %405 = arith.mulf %396, %404 : vector<2x8x8xf32>
    %406 = math.roundeven %405 : vector<2x8x8xf32>
    %cst_136 = arith.constant -1.280000e+02 : f32
    %cst_137 = arith.constant 1.270000e+02 : f32
    %407 = vector.broadcast %cst_136 : f32 to vector<2x8x8xf32>
    %408 = arith.maximumf %407, %406 : vector<2x8x8xf32>
    %409 = vector.broadcast %cst_137 : f32 to vector<2x8x8xf32>
    %410 = arith.minimumf %409, %408 : vector<2x8x8xf32>
    %cst_138 = arith.constant 0.00787401571 : f32
    %411 = vector.broadcast %cst_138 : f32 to vector<2x8x1xf32>
    %412 = arith.mulf %401, %411 : vector<2x8x1xf32>
    %413 = vector.broadcast %412 : vector<2x8x1xf32> to vector<2x8x8xf32>
    %414 = arith.mulf %410, %413 : vector<2x8x8xf32>
    %415 = arith.truncf %376 : vector<2x8x8xf32> to vector<2x8x8xbf16>
    %416 = arith.truncf %393 : vector<2x8x8xf32> to vector<2x8x8xbf16>
    "tpu.trace_start"() <{level = 10 : i32, message = "bqd,bkd->bqk"}> : () -> ()
    %cst_139 = arith.constant dense<0.000000e+00> : vector<2x8x8xf32>
    %417 = tpu.matmul %415, %416, %cst_139 {dimension_numbers = #tpu.dot_dimension_numbers<[2], [2], [1], [1], [0, 0, 0, 1, 1, 1], [0], [0]>} : vector<2x8x8xbf16>, vector<2x8x8xbf16>, vector<2x8x8xf32> -> vector<2x8x8xf32>
    "tpu.trace_stop"() : () -> ()
    %cst_140 = arith.constant 0.353553385 : f32
    %418 = vector.broadcast %cst_140 : f32 to vector<2x8x1xf32>
    %419 = arith.mulf %378, %418 : vector<2x8x1xf32>
    %420 = vector.broadcast %419 : vector<2x8x1xf32> to vector<2x8x8xf32>
    %421 = arith.mulf %417, %420 : vector<2x8x8xf32>
    %422 = tpu.transpose %395, [0, 2, 1] : vector<2x8x1xf32> -> vector<2x1x8xf32>
    %423 = vector.broadcast %422 : vector<2x1x8xf32> to vector<2x8x8xf32>
    %424 = arith.mulf %421, %423 : vector<2x8x8xf32>
    %cst_141 = arith.constant dense<0xFF800000> : vector<2x8xf32>
    %425 = vector.multi_reduction <maximumf>, %424, %cst_141 [2] : vector<2x8x8xf32> to vector<2x8xf32>
    %cst_142 = arith.constant 0xFF800000 : f32
    %426 = vector.broadcast %cst_142 : f32 to vector<2x8xf32>
    %427 = arith.maximumf %426, %425 : vector<2x8xf32>
    %428 = vector.shape_cast %427 : vector<2x8xf32> to vector<2x8x1xf32>
    %429 = vector.broadcast %428 : vector<2x8x1xf32> to vector<2x8x8xf32>
    %430 = arith.subf %424, %429 : vector<2x8x8xf32>
    %431 = math.exp %430 : vector<2x8x8xf32>
    %cst_143 = arith.constant dense<0.000000e+00> : vector<2x8xf32>
    %432 = vector.multi_reduction <add>, %431, %cst_143 [2] : vector<2x8x8xf32> to vector<2x8xf32>
    %433 = vector.shape_cast %432 : vector<2x8xf32> to vector<2x8x1xf32>
    %434 = vector.broadcast %433 : vector<2x8x1xf32> to vector<2x8x8xf32>
    %435 = arith.divf %431, %434 : vector<2x8x8xf32>
    %436 = math.absf %435 : vector<2x8x8xf32>
    %cst_144 = arith.constant dense<0xFF800000> : vector<2x8xf32>
    %437 = vector.multi_reduction <maximumf>, %436, %cst_144 [2] : vector<2x8x8xf32> to vector<2x8xf32>
    %438 = vector.shape_cast %437 : vector<2x8xf32> to vector<2x8x1xf32>
    %cst_145 = arith.constant 9.99999974E-6 : f32
    %439 = vector.broadcast %cst_145 : f32 to vector<2x8x1xf32>
    %440 = arith.maximumf %438, %439 : vector<2x8x1xf32>
    %cst_146 = arith.constant 1.270000e+02 : f32
    %441 = vector.broadcast %cst_146 : f32 to vector<2x8x1xf32>
    %442 = arith.divf %441, %440 : vector<2x8x1xf32>
    %443 = vector.broadcast %442 : vector<2x8x1xf32> to vector<2x8x8xf32>
    %444 = arith.mulf %435, %443 : vector<2x8x8xf32>
    %445 = math.roundeven %444 : vector<2x8x8xf32>
    %cst_147 = arith.constant -1.280000e+02 : f32
    %cst_148 = arith.constant 1.270000e+02 : f32
    %446 = vector.broadcast %cst_147 : f32 to vector<2x8x8xf32>
    %447 = arith.maximumf %446, %445 : vector<2x8x8xf32>
    %448 = vector.broadcast %cst_148 : f32 to vector<2x8x8xf32>
    %449 = arith.minimumf %448, %447 : vector<2x8x8xf32>
    %cst_149 = arith.constant 0.00787401571 : f32
    %450 = vector.broadcast %cst_149 : f32 to vector<2x8x1xf32>
    %451 = arith.mulf %440, %450 : vector<2x8x1xf32>
    %452 = vector.broadcast %451 : vector<2x8x1xf32> to vector<2x8x8xf32>
    %453 = arith.mulf %449, %452 : vector<2x8x8xf32>
    "tpu.trace_start"() <{level = 10 : i32, message = "bqk,bkd->bqd"}> : () -> ()
    %cst_150 = arith.constant dense<0.000000e+00> : vector<2x8x8xf32>
    %454 = tpu.matmul %453, %414, %cst_150 {dimension_numbers = #tpu.dot_dimension_numbers<[2], [1], [1], [2], [0, 0, 0, 1, 1, 2], [0], [0]>} : vector<2x8x8xf32>, vector<2x8x8xf32>, vector<2x8x8xf32> -> vector<2x8x8xf32>
    "tpu.trace_stop"() : () -> ()
    %455 = math.absf %454 : vector<2x8x8xf32>
    %cst_151 = arith.constant dense<0xFF800000> : vector<2x8xf32>
    %456 = vector.multi_reduction <maximumf>, %455, %cst_151 [2] : vector<2x8x8xf32> to vector<2x8xf32>
    %457 = vector.shape_cast %456 : vector<2x8xf32> to vector<2x8x1xf32>
    %cst_152 = arith.constant 9.99999974E-6 : f32
    %458 = vector.broadcast %cst_152 : f32 to vector<2x8x1xf32>
    %459 = arith.maximumf %457, %458 : vector<2x8x1xf32>
    %cst_153 = arith.constant 1.270000e+02 : f32
    %460 = vector.broadcast %cst_153 : f32 to vector<2x8x1xf32>
    %461 = arith.divf %460, %459 : vector<2x8x1xf32>
    %462 = vector.broadcast %461 : vector<2x8x1xf32> to vector<2x8x8xf32>
    %463 = arith.mulf %454, %462 : vector<2x8x8xf32>
    %464 = math.roundeven %463 : vector<2x8x8xf32>
    %cst_154 = arith.constant -1.280000e+02 : f32
    %cst_155 = arith.constant 1.270000e+02 : f32
    %465 = vector.broadcast %cst_154 : f32 to vector<2x8x8xf32>
    %466 = arith.maximumf %465, %464 : vector<2x8x8xf32>
    %467 = vector.broadcast %cst_155 : f32 to vector<2x8x8xf32>
    %468 = arith.minimumf %467, %466 : vector<2x8x8xf32>
    %cst_156 = arith.constant 0.00787401571 : f32
    %469 = vector.broadcast %cst_156 : f32 to vector<2x8x1xf32>
    %470 = arith.mulf %459, %469 : vector<2x8x1xf32>
    %471 = vector.broadcast %470 : vector<2x8x1xf32> to vector<2x8x8xf32>
    %472 = arith.mulf %468, %471 : vector<2x8x8xf32>
    %473 = tpu.concatenate %139, %250, %361, %472 in 2 : vector<2x8x8xf32>, vector<2x8x8xf32>, vector<2x8x8xf32>, vector<2x8x8xf32> -> vector<2x8x32xf32>
    %474 = vector.shape_cast %473 : vector<2x8x32xf32> to vector<16x32xf32>
    %c0_157 = arith.constant 0 : index
    %c0_158 = arith.constant 0 : index
    %475 = vector.load %arg4[%c0_157, %c0_158] : memref<32x32xf32, #tpu.memory_space<vmem>>, vector<32x32xf32>
    %cst_159 = arith.constant dense<0.000000e+00> : vector<16x32xf32>
    %476 = tpu.matmul %474, %475, %cst_159 {dimension_numbers = #tpu.dot_dimension_numbers<[1], [0], [0], [1], [0, 0, 1, 1], [], []>} : vector<16x32xf32>, vector<32x32xf32>, vector<16x32xf32> -> vector<16x32xf32>
    %c0_160 = arith.constant 0 : index
    %c0_161 = arith.constant 0 : index
    %477 = vector.load %arg5[%c0_160, %c0_161] : memref<1x32xf32, #tpu.memory_space<vmem>>, vector<1x32xf32>
    %478 = vector.broadcast %477 : vector<1x32xf32> to vector<16x32xf32>
    %479 = arith.addf %476, %478 : vector<16x32xf32>
    %480 = math.absf %479 : vector<16x32xf32>
    %cst_162 = arith.constant dense<0xFF800000> : vector<16xf32>
    %481 = vector.multi_reduction <maximumf>, %480, %cst_162 [1] : vector<16x32xf32> to vector<16xf32>
    %482 = vector.shape_cast %481 : vector<16xf32> to vector<16x1xf32>
    %cst_163 = arith.constant 9.99999974E-6 : f32
    %483 = vector.broadcast %cst_163 : f32 to vector<16x1xf32>
    %484 = arith.maximumf %482, %483 : vector<16x1xf32>
    %cst_164 = arith.constant 1.270000e+02 : f32
    %485 = vector.broadcast %cst_164 : f32 to vector<16x1xf32>
    %486 = arith.divf %485, %484 : vector<16x1xf32>
    %487 = vector.broadcast %486 : vector<16x1xf32> to vector<16x32xf32>
    %488 = arith.mulf %479, %487 : vector<16x32xf32>
    %489 = math.roundeven %488 : vector<16x32xf32>
    %cst_165 = arith.constant -1.280000e+02 : f32
    %cst_166 = arith.constant 1.270000e+02 : f32
    %490 = vector.broadcast %cst_165 : f32 to vector<16x32xf32>
    %491 = arith.maximumf %490, %489 : vector<16x32xf32>
    %492 = vector.broadcast %cst_166 : f32 to vector<16x32xf32>
    %493 = arith.minimumf %492, %491 : vector<16x32xf32>
    %cst_167 = arith.constant 0.00787401571 : f32
    %494 = vector.broadcast %cst_167 : f32 to vector<16x1xf32>
    %495 = arith.mulf %484, %494 : vector<16x1xf32>
    %496 = vector.broadcast %495 : vector<16x1xf32> to vector<16x32xf32>
    %497 = arith.mulf %493, %496 : vector<16x32xf32>
    %c0_168 = arith.constant 0 : index
    %c0_169 = arith.constant 0 : index
    %498 = vector.load %arg6[%c0_168, %c0_169] : memref<16x32xf32, #tpu.memory_space<vmem>>, vector<16x32xf32>
    tpu.vector_store %arg6[%c0_168, %c0_169], %497 {strides = array<i32>} : memref<16x32xf32, #tpu.memory_space<vmem>>, vector<16x32xf32>,
    return
  }
}

</mosaic_0001>

<llo_original>
// kernel: gain_cell_attention.1
$region0: #{gain_cell_attention.1}
  #allocation0 [shape = 'u32[]', space=smem, size = 0x4, offset = 0x4, fixed_abs, tag = 'smem constant byte address 0x4 - core index']
  #allocation1 [shape = 'u32[72,128]{1,0:T(1,128)}', space=vmem, size = 0x9000, scoped, tag = 'internal scratch']
  %s0 = inlined_call_operand.vmem [shape: f32[16,32], index: 0, kind: input, shape index: {}]
  %s1 = inlined_call_operand.vmem [shape: bf16[32,96], index: 1, kind: input, shape index: {}]
  %s2 = inlined_call_operand.vmem [shape: f32[1,96], index: 2, kind: input, shape index: {}]
  %s3 = inlined_call_operand.vmem [shape: f32[1,96], index: 3, kind: input, shape index: {}]
  %s4 = inlined_call_operand.vmem [shape: f32[32,32], index: 4, kind: input, shape index: {}]
  %s5 = inlined_call_operand.vmem [shape: f32[1,32], index: 5, kind: input, shape index: {}]
  %s6 = inlined_call_operand.hbm [shape: f32[16,32], index: 6, kind: output, shape index: {}]
  %s7 = sld [smem:[#allocation0]]
  $region34: #{gain_cell_attention.1} parent=0
    _
  %s9 = ssub.s32 1, %s7
  %s10 = scalar_select 0, %s9, %s7
  $region1: #{gain_cell_attention.1} parent=0
    #allocation2 [shape = 'u8[8192]{0}', space=vmem, size = 0x2000, scoped, tag = 'output window, operand 0, single buffered']
    #allocation3 [shape = 's32[1]{0}', space=sflag, size = 0x4, scoped, tag = 'scoped memory for gain_cell_attention.1']
    %11 = vsyncpa [#allocation3], 0
    // Predicated region
    $region2: #{gain_cell_attention.1} parent=1 // pred_check
      _
    $region3: #{gain_cell_attention.1} parent=1 // pred_check_branch
      %13 = sbr.rel (0) target = $region5
    $region4: #{gain_cell_attention.1} parent=1 // pred_region
      _
    $region5: #{gain_cell_attention.1} parent=1 // pred_fallthru
      _
    // Predicated region
    $region6: #{gain_cell_attention.1} parent=1 // pred_check
      _
    $region7: #{gain_cell_attention.1} parent=1 // pred_check_branch
      %15 = sbr.rel (0) target = $region9
    $region8: #{gain_cell_attention.1} parent=1 // pred_region
      _
    $region9: #{gain_cell_attention.1} parent=1 // pred_fallthru
      _
    // Predicated region
    $region10: #{gain_cell_attention.1} parent=1 // pred_check
      _
    $region11: #{gain_cell_attention.1} parent=1 // pred_check_branch
      %17 = sbr.rel (0) target = $region13
    $region12: #{gain_cell_attention.1} parent=1 // pred_region
      _
    $region13: #{gain_cell_attention.1} parent=1 // pred_fallthru
      _
    // Predicated region
    $region14: #{gain_cell_attention.1} parent=1 // pred_check
      _
    $region15: #{gain_cell_attention.1} parent=1 // pred_check_branch
      %19 = sbr.rel (0) target = $region17
    $region16: #{gain_cell_attention.1} parent=1 // pred_region
      _
    $region17: #{gain_cell_attention.1} parent=1 // pred_fallthru
      _
    // Predicated region
    $region18: #{gain_cell_attention.1} parent=1 // pred_check
      _
    $region19: #{gain_cell_attention.1} parent=1 // pred_check_branch
      %21 = sbr.rel (0) target = $region21
    $region20: #{gain_cell_attention.1} parent=1 // pred_region
      _
    $region21: #{gain_cell_attention.1} parent=1 // pred_fallthru
      _
    // Predicated region
    $region22: #{gain_cell_attention.1} parent=1 // pred_check
      _
    $region23: #{gain_cell_attention.1} parent=1 // pred_check_branch
      %23 = sbr.rel (0) target = $region25
    $region24: #{gain_cell_attention.1} parent=1 // pred_region
      _
    $region25: #{gain_cell_attention.1} parent=1 // pred_fallthru
      _
    %v25 = vld [vmem:[%s0] sm:$0xff]
    %v26 = vld [vmem:[%s0 + $0x8] sm:$0xff]
    %v27 = vand.u32 2147483647, %v25
    %v28 = vand.u32 2147483647, %v26
    %vm29 = vcmask 261120
    %v30 = vsel %vm29, %v27, -inf
    %31 = vmax.xlane.f32.xlu0 %v30
    %v32 = vpop.xlane.xlu0 %31
    %v33 = vsel %vm29, %v28, -inf
    %34 = vmax.xlane.f32.xlu0 %v33
    %v35 = vpop.xlane.xlu0 %34
    %v36 = vmax.f32 %v32, 1e-05
    %v37 = vmax.f32 %v35, 1e-05
    %v38 = vrcp.pop %v36
    %v39 = vmul.f32 %v36, %v38
    %v40 = vsub.f32 1.0, %v39
    %v41 = vmul.f32 %v38, %v40
    %v42 = vadd.f32 %v38, %v41
    %vm43 = vweird.f32 %v36
    %vm44 = vweird.f32 %v38
    %vm45 = vmor %vm43, %vm44
    %v46 = vsel %vm45, %v38, %v42
    %v47 = vand.u32 2147483647, %v36
    %vm48 = vcmp.eq.f32.partialorder %v47, 8.507059e+37
    %v49 = vand.u32 %v36, 2147483648
    %v50 = vor.u32 1.1754944e-38, %v49
    %v51 = vsel %vm48, %v50, %v46
    %v52 = vmul.f32 127.0, %v51
    %v53 = vrcp.pop %v37
    %v54 = vmul.f32 %v37, %v53
    %v55 = vsub.f32 1.0, %v54
    %v56 = vmul.f32 %v53, %v55
    %v57 = vadd.f32 %v53, %v56
    %vm58 = vweird.f32 %v37
    %vm59 = vweird.f32 %v53
    %vm60 = vmor %vm58, %vm59
    %v61 = vsel %vm60, %v53, %v57
    %v62 = vand.u32 2147483647, %v37
    %vm63 = vcmp.eq.f32.partialorder %v62, 8.507059e+37
    %v64 = vand.u32 %v37, 2147483648
    %v65 = vor.u32 1.1754944e-38, %v64
    %v66 = vsel %vm63, %v65, %v61
    %v67 = vmul.f32 127.0, %v66
    %v68 = vmul.f32 %v25, %v52
    %v69 = vmul.f32 %v26, %v67
    %v70 = vround.ne.pseudo %v68
    %v71 = vround.ne.pseudo %v69
    %v72 = vmax.f32 %v70, -128.0
    %v73 = vmax.f32 %v71, -128.0
    %v74 = vmin.f32 %v72, 127.0
    %v75 = vmin.f32 %v73, 127.0
    %v76 = vmul.f32 %v36, 0.007874016
    %v77 = vmul.f32 %v37, 0.007874016
    %v78 = vpack.c.bf16 %v75, %v74
    %v79 = vld [vmem:[%s1] sm:$0xf]
    %v80 = vld [vmem:[%s1 + $0x4] sm:$0xf]
    %v81 = vld [vmem:[%s1 + $0x8] sm:$0xf]
    %v82 = vld [vmem:[%s1 + $0xc] sm:$0xf]
    %v87 = vunpack.c.l.b16 %v79
    %v88 = vunpack.c.l.b16 %v80
    %v89 = vunpack.c.l.b16 %v81
    %v90 = vunpack.c.l.b16 %v82
    %v91 = vpack.c.b16 %v88, %v87
    %v92 = vpack.c.b16 %v90, %v89
    %v96 = vsel %vm29, %v78, 0
    %98 = vmatpush.bf16.msra.mxu0 0
    %99 = vmatpush.bf16.msra.mxu0 0
    %100 = vmatpush.bf16.msra.mxu0 0
    %101 = vmatpush.bf16.msra.mxu0 0
    %102 = vmatpush.bf16.msra.mxu0 0
    %103 = vmatpush.bf16.msra.mxu0 0
    %104 = vmatpush.bf16.msra.mxu0 %v92
    %105 = vmatpush.bf16.msra.mxu0 %v91
    %106 = vmatmul.bf16.gmra.mxu0 %v96
    %v107 = vpop.f32.mrf.mxu0
    %v108 = vadd.f32 0.0, %v107
    %v109 = vpop.f32.mrf.mxu0
    %v110 = vadd.f32 0.0, %v109
    %111 = vdwg.mxu0
    %v112 = vmul.f32 %v108, %v76
    %v113 = vmul.f32 %v110, %v77
    %v114 = vld [vmem:[%s2] sm:$0x1]
    %v116 = vperm.slane %v114, 0
    %v118 = vmul.f32 %v112, %v116
    %v119 = vmul.f32 %v113, %v116
    %v120 = vld [vmem:[%s3] sm:$0x1]
    %v122 = vperm.slane %v120, 0
    %v124 = vadd.f32 %v118, %v122
    %v125 = vadd.f32 %v119, %v122
    %v126 = vand.u32 2147483647, %v124
    %v127 = vand.u32 2147483647, %v125
    %vm128 = vcmask 64512
    %v129 = vsel %vm128, %v126, -inf
    %130 = vmax.xlane.f32.xlu0 %v129
    %v131 = vpop.xlane.xlu0 %130
    %v132 = vsel %vm128, %v127, -inf
    %133 = vmax.xlane.f32.xlu0 %v132
    %v134 = vpop.xlane.xlu0 %133
    %v135 = vmax.f32 %v131, 1e-05
    %v136 = vmax.f32 %v134, 1e-05
    %v137 = vrcp.pop %v135
    %v138 = vmul.f32 %v135, %v137
    %v139 = vsub.f32 1.0, %v138
    %v140 = vmul.f32 %v137, %v139
    %v141 = vadd.f32 %v137, %v140
    %vm142 = vweird.f32 %v135
    %vm143 = vweird.f32 %v137
    %vm144 = vmor %vm142, %vm143
    %v145 = vsel %vm144, %v137, %v141
    %v146 = vand.u32 2147483647, %v135
    %vm147 = vcmp.eq.f32.partialorder %v146, 8.507059e+37
    %v148 = vand.u32 %v135, 2147483648
    %v149 = vor.u32 1.1754944e-38, %v148
    %v150 = vsel %vm147, %v149, %v145
    %v151 = vmul.f32 127.0, %v150
    %v152 = vrcp.pop %v136
    %v153 = vmul.f32 %v136, %v152
    %v154 = vsub.f32 1.0, %v153
    %v155 = vmul.f32 %v152, %v154
    %v156 = vadd.f32 %v152, %v155
    %vm157 = vweird.f32 %v136
    %vm158 = vweird.f32 %v152
    %vm159 = vmor %vm157, %vm158
    %v160 = vsel %vm159, %v152, %v156
    %v161 = vand.u32 2147483647, %v136
    %vm162 = vcmp.eq.f32.partialorder %v161, 8.507059e+37
    %v163 = vand.u32 %v136, 2147483648
    %v164 = vor.u32 1.1754944e-38, %v163
    %v165 = vsel %vm162, %v164, %v160
    %v166 = vmul.f32 127.0, %v165
    %v167 = vmul.f32 %v124, %v151
    %v168 = vmul.f32 %v125, %v166
    %v169 = vround.ne.pseudo %v167
    %v170 = vround.ne.pseudo %v168
    %v171 = vmax.f32 %v169, -128.0
    %v172 = vmax.f32 %v170, -128.0
    %v173 = vmin.f32 %v171, 127.0
    %v174 = vmin.f32 %v172, 127.0
    %v175 = vmul.f32 %v135, 0.007874016
    %v176 = vmul.f32 %v136, 0.007874016
    %vm177 = vcmask 326912
    %v178 = vsel %vm177, %v126, -inf
    %179 = vmax.xlane.f32.xlu0 %v178
    %v180 = vpop.xlane.xlu0 %179
    %v181 = vsel %vm177, %v127, -inf
    %182 = vmax.xlane.f32.xlu0 %v181
    %v183 = vpop.xlane.xlu0 %182
    %v184 = vmax.f32 %v180, 1e-05
    %v185 = vmax.f32 %v183, 1e-05
    %v186 = vrcp.pop %v184
    %v187 = vmul.f32 %v184, %v186
    %v188 = vsub.f32 1.0, %v187
    %v189 = vmul.f32 %v186, %v188
    %v190 = vadd.f32 %v186, %v189
    %vm191 = vweird.f32 %v184
    %vm192 = vweird.f32 %v186
    %vm193 = vmor %vm191, %vm192
    %v194 = vsel %vm193, %v186, %v190
    %v195 = vand.u32 2147483647, %v184
    %vm196 = vcmp.eq.f32.partialorder %v195, 8.507059e+37
    %v197 = vand.u32 %v184, 2147483648
    %v198 = vor.u32 1.1754944e-38, %v197
    %v199 = vsel %vm196, %v198, %v194
    %v200 = vmul.f32 127.0, %v199
    %v201 = vrcp.pop %v185
    %v202 = vmul.f32 %v185, %v201
    %v203 = vsub.f32 1.0, %v202
    %v204 = vmul.f32 %v201, %v203
    %v205 = vadd.f32 %v201, %v204
    %vm206 = vweird.f32 %v185
    %vm207 = vweird.f32 %v201
    %vm208 = vmor %vm206, %vm207
    %v209 = vsel %vm208, %v201, %v205
    %v210 = vand.u32 2147483647, %v185
    %vm211 = vcmp.eq.f32.partialorder %v210, 8.507059e+37
    %v212 = vand.u32 %v185, 2147483648
    %v213 = vor.u32 1.1754944e-38, %v212
    %v214 = vsel %vm211, %v213, %v209
    %v215 = vmul.f32 127.0, %v214
    %v216 = vmul.f32 %v124, %v200
    %v217 = vmul.f32 %v125, %v215
    %v218 = vround.ne.pseudo %v216
    %v219 = vround.ne.pseudo %v217
    %v220 = vmax.f32 %v218, -128.0
    %v221 = vmax.f32 %v219, -128.0
    %v222 = vmin.f32 %v220, 127.0
    %v223 = vmin.f32 %v221, 127.0
    %v224 = vmul.f32 %v184, 0.007874016
    %v225 = vmul.f32 %v185, 0.007874016
    %vm226 = vcmask 589312
    %v227 = vsel %vm226, %v126, -inf
    %228 = vmax.xlane.f32.xlu0 %v227
    %v229 = vpop.xlane.xlu0 %228
    %v230 = vsel %vm226, %v127, -inf
    %231 = vmax.xlane.f32.xlu0 %v230
    %v232 = vpop.xlane.xlu0 %231
    %v233 = vmax.f32 %v229, 1e-05
    %v234 = vmax.f32 %v232, 1e-05
    %v235 = vrcp.pop %v233
    %v236 = vmul.f32 %v233, %v235
    %v237 = vsub.f32 1.0, %v236
    %v238 = vmul.f32 %v235, %v237
    %v239 = vadd.f32 %v235, %v238
    %vm240 = vweird.f32 %v233
    %vm241 = vweird.f32 %v235
    %vm242 = vmor %vm240, %vm241
    %v243 = vsel %vm242, %v235, %v239
    %v244 = vand.u32 2147483647, %v233
    %vm245 = vcmp.eq.f32.partialorder %v244, 8.507059e+37
    %v246 = vand.u32 %v233, 2147483648
    %v247 = vor.u32 1.1754944e-38, %v246
    %v248 = vsel %vm245, %v247, %v243
    %v249 = vmul.f32 127.0, %v248
    %v250 = vrcp.pop %v234
    %v251 = vmul.f32 %v234, %v250
    %v252 = vsub.f32 1.0, %v251
    %v253 = vmul.f32 %v250, %v252
    %v254 = vadd.f32 %v250, %v253
    %vm255 = vweird.f32 %v234
    %vm256 = vweird.f32 %v250
    %vm257 = vmor %vm255, %vm256
    %v258 = vsel %vm257, %v250, %v254
    %v259 = vand.u32 2147483647, %v234
    %vm260 = vcmp.eq.f32.partialorder %v259, 8.507059e+37
    %v261 = vand.u32 %v234, 2147483648
    %v262 = vor.u32 1.1754944e-38, %v261
    %v263 = vsel %vm260, %v262, %v258
    %v264 = vmul.f32 127.0, %v263
    %v265 = vmul.f32 %v124, %v249
    %v266 = vmul.f32 %v125, %v264
    %v267 = vround.ne.pseudo %v265
    %v268 = vround.ne.pseudo %v266
    %v269 = vmax.f32 %v267, -128.0
    %v270 = vmax.f32 %v268, -128.0
    %v271 = vmin.f32 %v269, 127.0
    %v272 = vmin.f32 %v270, 127.0
    %v273 = vmul.f32 %v233, 0.007874016
    %v274 = vmul.f32 %v234, 0.007874016
    %v275 = vmul.f32 %v271, %v273
    %v276 = vmul.f32 %v272, %v274
    %v277 = vpack.c.bf16 %v173, %v173
    %v278 = vpack.c.bf16 %v174, %v174
    %v279 = vpack.c.bf16 %v222, %v222
    %v280 = vpack.c.bf16 %v223, %v223
    %v282 = vunpack.c.l.b16 %v279
    %v283 = vpack.c.b16 %v282, %v282
    %284 = vrot.lane.b32.xlu0 %v283, 96
    %v285 = vpop.permute.xlu0 %284
    %v287 = vsel %vm128, %v277, 0
    %v290 = vsel %vm128, %v285, 0
    %292 = vmatpush.bf16.xpose.msra.mxu0 0
    %293 = vmatpush.bf16.xpose.msra.mxu0 0
    %294 = vmatpush.bf16.xpose.msra.mxu0 0
    %295 = vmatpush.bf16.xpose.msra.mxu0 0
    %296 = vmatpush.bf16.xpose.msra.mxu0 0
    %297 = vmatpush.bf16.xpose.msra.mxu0 0
    %298 = vmatpush.bf16.xpose.msra.mxu0 0
    %299 = vmatpush.bf16.xpose.msra.mxu0 %v290
    %300 = vmatmul.bf16.gmra.mxu0 %v287
    %v301 = vpop.f32.mrf.mxu0
    %v302 = vadd.f32 0.0, %v301
    %v303 = vpop.f32.mrf.mxu0
    %304 = vdwg.mxu0
    %v306 = vunpack.c.l.b16 %v280
    %v307 = vpack.c.b16 %v306, %v306
    %308 = vrot.lane.b32.xlu0 %v307, 96
    %v309 = vpop.permute.xlu0 %308
    %v311 = vsel %vm128, %v278, 0
    %v314 = vsel %vm128, %v309, 0
    %316 = vmatpush.bf16.xpose.msra.mxu0 0
    %317 = vmatpush.bf16.xpose.msra.mxu0 0
    %318 = vmatpush.bf16.xpose.msra.mxu0 0
    %319 = vmatpush.bf16.xpose.msra.mxu0 0
    %320 = vmatpush.bf16.xpose.msra.mxu0 0
    %321 = vmatpush.bf16.xpose.msra.mxu0 0
    %322 = vmatpush.bf16.xpose.msra.mxu0 0
    %323 = vmatpush.bf16.xpose.msra.mxu0 %v314
    %324 = vmatmul.bf16.gmra.mxu0 %v311
    %v325 = vpop.f32.mrf.mxu0
    %v326 = vadd.f32 0.0, %v325
    %v327 = vpop.f32.mrf.mxu0
    %328 = vdwg.mxu0
    %v329 = vmul.f32 %v175, 0.35355338
    %v330 = vmul.f32 %v176, 0.35355338
    %v331 = vmul.f32 %v302, %v329
    %v332 = vmul.f32 %v326, %v330
    %333 = vxpose.xlu0.b32.start [1/16] %v224, 128
    %334 = vxpose.xlu0.b32.cont [2/16] 0.0, 128
    %335 = vxpose.xlu0.b32.cont [3/16] 0.0, 128
    %336 = vxpose.xlu0.b32.cont [4/16] 0.0, 128
    %337 = vxpose.xlu0.b32.cont [5/16] 0.0, 128
    %338 = vxpose.xlu0.b32.cont [6/16] 0.0, 128
    %339 = vxpose.xlu0.b32.cont [7/16] 0.0, 128
    %340 = vxpose.xlu0.b32.cont [8/16] 0.0, 128
    %341 = vxpose.xlu0.b32.cont [9/16] 0.0, 128
    %342 = vxpose.xlu0.b32.cont [10/16] 0.0, 128
    %343 = vxpose.xlu0.b32.cont [11/16] 0.0, 128
    %344 = vxpose.xlu0.b32.cont [12/16] 0.0, 128
    %345 = vxpose.xlu0.b32.cont [13/16] 0.0, 128
    %346 = vxpose.xlu0.b32.cont [14/16] 0.0, 128
    %347 = vxpose.xlu0.b32.cont [15/16] 0.0, 128
    %348 = vxpose.xlu0.b32.end [16/16] 0.0, 128
    %v349 = vpop.trf.xlu0
    %v350 = vpop.trf.xlu0
    %v351 = vpop.trf.xlu0
    %v352 = vpop.trf.xlu0
    %v353 = vpop.trf.xlu0
    %v354 = vpop.trf.xlu0
    %v355 = vpop.trf.xlu0
    %v356 = vpop.trf.xlu0
    %v357 = vpop.trf.xlu0
    %v358 = vpop.trf.xlu0
    %v359 = vpop.trf.xlu0
    %v360 = vpop.trf.xlu0
    %v361 = vpop.trf.xlu0
    %v362 = vpop.trf.xlu0
    %v363 = vpop.trf.xlu0
    %v364 = vpop.trf.xlu0
    %365 = vxpose.xlu0.b32.start [1/16] %v225, 128
    %366 = vxpose.xlu0.b32.cont [2/16] 0.0, 128
    %367 = vxpose.xlu0.b32.cont [3/16] 0.0, 128
    %368 = vxpose.xlu0.b32.cont [4/16] 0.0, 128
    %369 = vxpose.xlu0.b32.cont [5/16] 0.0, 128
    %370 = vxpose.xlu0.b32.cont [6/16] 0.0, 128
    %371 = vxpose.xlu0.b32.cont [7/16] 0.0, 128
    %372 = vxpose.xlu0.b32.cont [8/16] 0.0, 128
    %373 = vxpose.xlu0.b32.cont [9/16] 0.0, 128
    %374 = vxpose.xlu0.b32.cont [10/16] 0.0, 128
    %375 = vxpose.xlu0.b32.cont [11/16] 0.0, 128
    %376 = vxpose.xlu0.b32.cont [12/16] 0.0, 128
    %377 = vxpose.xlu0.b32.cont [13/16] 0.0, 128
    %378 = vxpose.xlu0.b32.cont [14/16] 0.0, 128
    %379 = vxpose.xlu0.b32.cont [15/16] 0.0, 128
    %380 = vxpose.xlu0.b32.end [16/16] 0.0, 128
    %v381 = vpop.trf.xlu0
    %v382 = vpop.trf.xlu0
    %v383 = vpop.trf.xlu0
    %v384 = vpop.trf.xlu0
    %v385 = vpop.trf.xlu0
    %v386 = vpop.trf.xlu0
    %v387 = vpop.trf.xlu0
    %v388 = vpop.trf.xlu0
    %v389 = vpop.trf.xlu0
    %v390 = vpop.trf.xlu0
    %v391 = vpop.trf.xlu0
    %v392 = vpop.trf.xlu0
    %v393 = vpop.trf.xlu0
    %v394 = vpop.trf.xlu0
    %v395 = vpop.trf.xlu0
    %v396 = vpop.trf.xlu0
    %v397 = vperm.slane %v349, 0
    %v398 = vperm.slane %v381, 0
    %v399 = vmul.f32 %v331, %v397
    %v400 = vmul.f32 %v332, %v398
    %v401 = vsel %vm128, %v399, -inf
    %402 = vmax.xlane.f32.xlu0 %v401
    %v403 = vpop.xlane.xlu0 %402
    %v404 = vsel %vm128, %v400, -inf
    %405 = vmax.xlane.f32.xlu0 %v404
    %v406 = vpop.xlane.xlu0 %405
    %v407 = vsub.f32 %v399, %v403
    %v408 = vsub.f32 %v400, %v406
    %v409 = vmul.f32 %v407, 1.442695
    %v410 = vpow.pop %v409
    %v411 = vmul.f32 %v408, 1.442695
    %v412 = vpow.pop %v411
    %v413 = vsel %vm128, %v410, 0.0
    %414 = vadd.xlane.f32.xlu0 %v413
    %v415 = vpop.xlane.xlu0 %414
    %v416 = vsel %vm128, %v412, 0.0
    %417 = vadd.xlane.f32.xlu0 %v416
    %v418 = vpop.xlane.xlu0 %417
    %v419 = vrcp.pop %v415
    %v420 = vmul.f32 %v415, %v419
    %v421 = vsub.f32 1.0, %v420
    %v422 = vmul.f32 %v419, %v421
    %v423 = vadd.f32 %v419, %v422
    %vm424 = vweird.f32 %v415
    %vm425 = vweird.f32 %v419
    %vm426 = vmor %vm424, %vm425
    %v427 = vsel %vm426, %v419, %v423
    %v428 = vand.u32 2147483647, %v415
    %vm429 = vcmp.eq.f32.partialorder %v428, 8.507059e+37
    %v430 = vand.u32 %v415, 2147483648
    %v431 = vor.u32 1.1754944e-38, %v430
    %v432 = vsel %vm429, %v431, %v427
    %v433 = vmul.f32 %v410, %v432
    %v434 = vrcp.pop %v418
    %v435 = vmul.f32 %v418, %v434
    %v436 = vsub.f32 1.0, %v435
    %v437 = vmul.f32 %v434, %v436
    %v438 = vadd.f32 %v434, %v437
    %vm439 = vweird.f32 %v418
    %vm440 = vweird.f32 %v434
    %vm441 = vmor %vm439, %vm440
    %v442 = vsel %vm441, %v434, %v438
    %v443 = vand.u32 2147483647, %v418
    %vm444 = vcmp.eq.f32.partialorder %v443, 8.507059e+37
    %v445 = vand.u32 %v418, 2147483648
    %v446 = vor.u32 1.1754944e-38, %v445
    %v447 = vsel %vm444, %v446, %v442
    %v448 = vmul.f32 %v412, %v447
    %v449 = vand.u32 2147483647, %v433
    %v450 = vand.u32 2147483647, %v448
    %v451 = vsel %vm128, %v449, -inf
    %452 = vmax.xlane.f32.xlu0 %v451
    %v453 = vpop.xlane.xlu0 %452
    %v454 = vsel %vm128, %v450, -inf
    %455 = vmax.xlane.f32.xlu0 %v454
    %v456 = vpop.xlane.xlu0 %455
    %v457 = vmax.f32 %v453, 1e-05
    %v458 = vmax.f32 %v456, 1e-05
    %v459 = vrcp.pop %v457
    %v460 = vmul.f32 %v457, %v459
    %v461 = vsub.f32 1.0, %v460
    %v462 = vmul.f32 %v459, %v461
    %v463 = vadd.f32 %v459, %v462
    %vm464 = vweird.f32 %v457
    %vm465 = vweird.f32 %v459
    %vm466 = vmor %vm464, %vm465
    %v467 = vsel %vm466, %v459, %v463
    %v468 = vand.u32 2147483647, %v457
    %vm469 = vcmp.eq.f32.partialorder %v468, 8.507059e+37
    %v470 = vand.u32 %v457, 2147483648
    %v471 = vor.u32 1.1754944e-38, %v470
    %v472 = vsel %vm469, %v471, %v467
    %v473 = vmul.f32 127.0, %v472
    %v474 = vrcp.pop %v458
    %v475 = vmul.f32 %v458, %v474
    %v476 = vsub.f32 1.0, %v475
    %v477 = vmul.f32 %v474, %v476
    %v478 = vadd.f32 %v474, %v477
    %vm479 = vweird.f32 %v458
    %vm480 = vweird.f32 %v474
    %vm481 = vmor %vm479, %vm480
    %v482 = vsel %vm481, %v474, %v478
    %v483 = vand.u32 2147483647, %v458
    %vm484 = vcmp.eq.f32.partialorder %v483, 8.507059e+37
    %v485 = vand.u32 %v458, 2147483648
    %v486 = vor.u32 1.1754944e-38, %v485
    %v487 = vsel %vm484, %v486, %v482
    %v488 = vmul.f32 127.0, %v487
    %v489 = vmul.f32 %v433, %v473
    %v490 = vmul.f32 %v448, %v488
    %v491 = vround.ne.pseudo %v489
    %v492 = vround.ne.pseudo %v490
    %v493 = vmax.f32 %v491, -128.0
    %v494 = vmax.f32 %v492, -128.0
    %v495 = vmin.f32 %v493, 127.0
    %v496 = vmin.f32 %v494, 127.0
    %v497 = vmul.f32 %v457, 0.007874016
    %v498 = vmul.f32 %v458, 0.007874016
    %v499 = vmul.f32 %v495, %v497
    %v500 = vmul.f32 %v496, %v498
    %502 = vrot.lane.b32.xlu0 %v275, 64
    %v503 = vpop.permute.xlu0 %502
    %v506 = vsel %vm128, %v499, 0
    %508 = vmatpush.msra.mxu0 0.0
    %509 = vmatpush.msra.mxu0 0.0
    %510 = vmatpush.msra.mxu0 0.0
    %511 = vmatpush.msra.mxu0 0.0
    %512 = vmatpush.msra.mxu0 0.0
    %513 = vmatpush.msra.mxu0 0.0
    %514 = vmatpush.msra.mxu0 0.0
    %515 = vmatpush.msra.mxu0 0.0
    %516 = vmatpush.msra.mxu0 0.0
    %517 = vmatpush.msra.mxu0 0.0
    %518 = vmatpush.msra.mxu0 0.0
    %519 = vmatpush.msra.mxu0 0.0
    %520 = vmatpush.msra.mxu0 0.0
    %521 = vmatpush.msra.mxu0 0.0
    %522 = vmatpush.msra.mxu0 0.0
    %523 = vmatpush.msra.mxu0 %v503
    %524 = vmatmul.f32.gmra.mxu0 %v506
    %v525 = vpop.f32.mrf.mxu0
    %v526 = vadd.f32 0.0, %v525
    %527 = vdwg.mxu0
    %529 = vrot.lane.b32.xlu0 %v276, 64
    %v530 = vpop.permute.xlu0 %529
    %v533 = vsel %vm128, %v500, 0
    %535 = vmatpush.msra.mxu0 0.0
    %536 = vmatpush.msra.mxu0 0.0
    %537 = vmatpush.msra.mxu0 0.0
    %538 = vmatpush.msra.mxu0 0.0
    %539 = vmatpush.msra.mxu0 0.0
    %540 = vmatpush.msra.mxu0 0.0
    %541 = vmatpush.msra.mxu0 0.0
    %542 = vmatpush.msra.mxu0 0.0
    %543 = vmatpush.msra.mxu0 0.0
    %544 = vmatpush.msra.mxu0 0.0
    %545 = vmatpush.msra.mxu0 0.0
    %546 = vmatpush.msra.mxu0 0.0
    %547 = vmatpush.msra.mxu0 0.0
    %548 = vmatpush.msra.mxu0 0.0
    %549 = vmatpush.msra.mxu0 0.0
    %550 = vmatpush.msra.mxu0 %v530
    %551 = vmatmul.f32.gmra.mxu0 %v533
    %v552 = vpop.f32.mrf.mxu0
    %v553 = vadd.f32 0.0, %v552
    %554 = vdwg.mxu0
    %v555 = vand.u32 2147483647, %v526
    %v556 = vand.u32 2147483647, %v553
    %v557 = vsel %vm128, %v555, -inf
    %558 = vmax.xlane.f32.xlu0 %v557
    %v559 = vpop.xlane.xlu0 %558
    %v560 = vsel %vm128, %v556, -inf
    %561 = vmax.xlane.f32.xlu0 %v560
    %v562 = vpop.xlane.xlu0 %561
    %v563 = vmax.f32 %v559, 1e-05
    %v564 = vmax.f32 %v562, 1e-05
    %v565 = vrcp.pop %v563
    %v566 = vmul.f32 %v563, %v565
    %v567 = vsub.f32 1.0, %v566
    %v568 = vmul.f32 %v565, %v567
    %v569 = vadd.f32 %v565, %v568
    %vm570 = vweird.f32 %v563
    %vm571 = vweird.f32 %v565
    %vm572 = vmor %vm570, %vm571
    %v573 = vsel %vm572, %v565, %v569
    %v574 = vand.u32 2147483647, %v563
    %vm575 = vcmp.eq.f32.partialorder %v574, 8.507059e+37
    %v576 = vand.u32 %v563, 2147483648
    %v577 = vor.u32 1.1754944e-38, %v576
    %v578 = vsel %vm575, %v577, %v573
    %v579 = vmul.f32 127.0, %v578
    %v580 = vrcp.pop %v564
    %v581 = vmul.f32 %v564, %v580
    %v582 = vsub.f32 1.0, %v581
    %v583 = vmul.f32 %v580, %v582
    %v584 = vadd.f32 %v580, %v583
    %vm585 = vweird.f32 %v564
    %vm586 = vweird.f32 %v580
    %vm587 = vmor %vm585, %vm586
    %v588 = vsel %vm587, %v580, %v584
    %v589 = vand.u32 2147483647, %v564
    %vm590 = vcmp.eq.f32.partialorder %v589, 8.507059e+37
    %v591 = vand.u32 %v564, 2147483648
    %v592 = vor.u32 1.1754944e-38, %v591
    %v593 = vsel %vm590, %v592, %v588
    %v594 = vmul.f32 127.0, %v593
    %v595 = vmul.f32 %v526, %v579
    %v596 = vmul.f32 %v553, %v594
    %v597 = vround.ne.pseudo %v595
    %v598 = vround.ne.pseudo %v596
    %v599 = vmax.f32 %v597, -128.0
    %v600 = vmax.f32 %v598, -128.0
    %v601 = vmin.f32 %v599, 127.0
    %v602 = vmin.f32 %v600, 127.0
    %v603 = vmul.f32 %v563, 0.007874016
    %v604 = vmul.f32 %v564, 0.007874016
    %v605 = vmul.f32 %v601, %v603
    %v606 = vmul.f32 %v602, %v604
    %vm607 = vcmask 130112
    %v608 = vsel %vm607, %v126, -inf
    %609 = vmax.xlane.f32.xlu0 %v608
    %v610 = vpop.xlane.xlu0 %609
    %v611 = vsel %vm607, %v127, -inf
    %612 = vmax.xlane.f32.xlu0 %v611
    %v613 = vpop.xlane.xlu0 %612
    %v614 = vmax.f32 %v610, 1e-05
    %v615 = vmax.f32 %v613, 1e-05
    %v616 = vrcp.pop %v614
    %v617 = vmul.f32 %v614, %v616
    %v618 = vsub.f32 1.0, %v617
    %v619 = vmul.f32 %v616, %v618
    %v620 = vadd.f32 %v616, %v619
    %vm621 = vweird.f32 %v614
    %vm622 = vweird.f32 %v616
    %vm623 = vmor %vm621, %vm622
    %v624 = vsel %vm623, %v616, %v620
    %v625 = vand.u32 2147483647, %v614
    %vm626 = vcmp.eq.f32.partialorder %v625, 8.507059e+37
    %v627 = vand.u32 %v614, 2147483648
    %v628 = vor.u32 1.1754944e-38, %v627
    %v629 = vsel %vm626, %v628, %v624
    %v630 = vmul.f32 127.0, %v629
    %v631 = vrcp.pop %v615
    %v632 = vmul.f32 %v615, %v631
    %v633 = vsub.f32 1.0, %v632
    %v634 = vmul.f32 %v631, %v633
    %v635 = vadd.f32 %v631, %v634
    %vm636 = vweird.f32 %v615
    %vm637 = vweird.f32 %v631
    %vm638 = vmor %vm636, %vm637
    %v639 = vsel %vm638, %v631, %v635
    %v640 = vand.u32 2147483647, %v615
    %vm641 = vcmp.eq.f32.partialorder %v640, 8.507059e+37
    %v642 = vand.u32 %v615, 2147483648
    %v643 = vor.u32 1.1754944e-38, %v642
    %v644 = vsel %vm641, %v643, %v639
    %v645 = vmul.f32 127.0, %v644
    %v646 = vmul.f32 %v124, %v630
    %v647 = vmul.f32 %v125, %v645
    %v648 = vround.ne.pseudo %v646
    %v649 = vround.ne.pseudo %v647
    %v650 = vmax.f32 %v648, -128.0
    %v651 = vmax.f32 %v649, -128.0
    %v652 = vmin.f32 %v650, 127.0
    %v653 = vmin.f32 %v651, 127.0
    %v654 = vmul.f32 %v614, 0.007874016
    %v655 = vmul.f32 %v615, 0.007874016
    %vm656 = vcmask 392512
    %v657 = vsel %vm656, %v126, -inf
    %658 = vmax.xlane.f32.xlu0 %v657
    %v659 = vpop.xlane.xlu0 %658
    %v660 = vsel %vm656, %v127, -inf
    %661 = vmax.xlane.f32.xlu0 %v660
    %v662 = vpop.xlane.xlu0 %661
    %v663 = vmax.f32 %v659, 1e-05
    %v664 = vmax.f32 %v662, 1e-05
    %v665 = vrcp.pop %v663
    %v666 = vmul.f32 %v663, %v665
    %v667 = vsub.f32 1.0, %v666
    %v668 = vmul.f32 %v665, %v667
    %v669 = vadd.f32 %v665, %v668
    %vm670 = vweird.f32 %v663
    %vm671 = vweird.f32 %v665
    %vm672 = vmor %vm670, %vm671
    %v673 = vsel %vm672, %v665, %v669
    %v674 = vand.u32 2147483647, %v663
    %vm675 = vcmp.eq.f32.partialorder %v674, 8.507059e+37
    %v676 = vand.u32 %v663, 2147483648
    %v677 = vor.u32 1.1754944e-38, %v676
    %v678 = vsel %vm675, %v677, %v673
    %v679 = vmul.f32 127.0, %v678
    %v680 = vrcp.pop %v664
    %v681 = vmul.f32 %v664, %v680
    %v682 = vsub.f32 1.0, %v681
    %v683 = vmul.f32 %v680, %v682
    %v684 = vadd.f32 %v680, %v683
    %vm685 = vweird.f32 %v664
    %vm686 = vweird.f32 %v680
    %vm687 = vmor %vm685, %vm686
    %v688 = vsel %vm687, %v680, %v684
    %v689 = vand.u32 2147483647, %v664
    %vm690 = vcmp.eq.f32.partialorder %v689, 8.507059e+37
    %v691 = vand.u32 %v664, 2147483648
    %v692 = vor.u32 1.1754944e-38, %v691
    %v693 = vsel %vm690, %v692, %v688
    %v694 = vmul.f32 127.0, %v693
    %v695 = vmul.f32 %v124, %v679
    %v696 = vmul.f32 %v125, %v694
    %v697 = vround.ne.pseudo %v695
    %v698 = vround.ne.pseudo %v696
    %v699 = vmax.f32 %v697, -128.0
    %v700 = vmax.f32 %v698, -128.0
    %v701 = vmin.f32 %v699, 127.0
    %v702 = vmin.f32 %v700, 127.0
    %v703 = vmul.f32 %v663, 0.007874016
    %v704 = vmul.f32 %v664, 0.007874016
    %vm705 = vcmask 654912
    %v706 = vsel %vm705, %v126, -inf
    %707 = vmax.xlane.f32.xlu0 %v706
    %v708 = vpop.xlane.xlu0 %707
    %v709 = vsel %vm705, %v127, -inf
    %710 = vmax.xlane.f32.xlu0 %v709
    %v711 = vpop.xlane.xlu0 %710
    %v712 = vmax.f32 %v708, 1e-05
    %v713 = vmax.f32 %v711, 1e-05
    %v714 = vrcp.pop %v712
    %v715 = vmul.f32 %v712, %v714
    %v716 = vsub.f32 1.0, %v715
    %v717 = vmul.f32 %v714, %v716
    %v718 = vadd.f32 %v714, %v717
    %vm719 = vweird.f32 %v712
    %vm720 = vweird.f32 %v714
    %vm721 = vmor %vm719, %vm720
    %v722 = vsel %vm721, %v714, %v718
    %v723 = vand.u32 2147483647, %v712
    %vm724 = vcmp.eq.f32.partialorder %v723, 8.507059e+37
    %v725 = vand.u32 %v712, 2147483648
    %v726 = vor.u32 1.1754944e-38, %v725
    %v727 = vsel %vm724, %v726, %v722
    %v728 = vmul.f32 127.0, %v727
    %v729 = vrcp.pop %v713
    %v730 = vmul.f32 %v713, %v729
    %v731 = vsub.f32 1.0, %v730
    %v732 = vmul.f32 %v729, %v731
    %v733 = vadd.f32 %v729, %v732
    %vm734 = vweird.f32 %v713
    %vm735 = vweird.f32 %v729
    %vm736 = vmor %vm734, %vm735
    %v737 = vsel %vm736, %v729, %v733
    %v738 = vand.u32 2147483647, %v713
    %vm739 = vcmp.eq.f32.partialorder %v738, 8.507059e+37
    %v740 = vand.u32 %v713, 2147483648
    %v741 = vor.u32 1.1754944e-38, %v740
    %v742 = vsel %vm739, %v741, %v737
    %v743 = vmul.f32 127.0, %v742
    %v744 = vmul.f32 %v124, %v728
    %v745 = vmul.f32 %v125, %v743
    %v746 = vround.ne.pseudo %v744
    %v747 = vround.ne.pseudo %v745
    %v748 = vmax.f32 %v746, -128.0
    %v749 = vmax.f32 %v747, -128.0
    %v750 = vmin.f32 %v748, 127.0
    %v751 = vmin.f32 %v749, 127.0
    %v752 = vmul.f32 %v712, 0.007874016
    %v753 = vmul.f32 %v713, 0.007874016
    %v754 = vmul.f32 %v750, %v752
    %v755 = vmul.f32 %v751, %v753
    %v756 = vpack.c.bf16 %v652, %v652
    %v757 = vpack.c.bf16 %v653, %v653
    %v758 = vpack.c.bf16 %v701, %v701
    %v759 = vpack.c.bf16 %v702, %v702
    %v761 = vunpack.c.l.b16 %v756
    %v762 = vpack.c.b16 %v761, %v761
    %763 = vrot.lane.b32.xlu0 %v762, 120
    %v764 = vpop.permute.xlu0 %763
    %v766 = vunpack.c.l.b16 %v758
    %v767 = vpack.c.b16 %v766, %v766
    %768 = vrot.lane.b32.xlu0 %v767, 88
    %v769 = vpop.permute.xlu0 %768
    %v771 = vsel %vm128, %v764, 0
    %v774 = vsel %vm128, %v769, 0
    %776 = vmatpush.bf16.xpose.msra.mxu0 0
    %777 = vmatpush.bf16.xpose.msra.mxu0 0
    %778 = vmatpush.bf16.xpose.msra.mxu0 0
    %779 = vmatpush.bf16.xpose.msra.mxu0 0
    %780 = vmatpush.bf16.xpose.msra.mxu0 0
    %781 = vmatpush.bf16.xpose.msra.mxu0 0
    %782 = vmatpush.bf16.xpose.msra.mxu0 0
    %783 = vmatpush.bf16.xpose.msra.mxu0 %v774
    %784 = vmatmul.bf16.gmra.mxu0 %v771
    %v785 = vpop.f32.mrf.mxu0
    %v786 = vadd.f32 0.0, %v785
    %v787 = vpop.f32.mrf.mxu0
    %788 = vdwg.mxu0
    %v790 = vunpack.c.l.b16 %v757
    %v791 = vpack.c.b16 %v790, %v790
    %792 = vrot.lane.b32.xlu0 %v791, 120
    %v793 = vpop.permute.xlu0 %792
    %v795 = vunpack.c.l.b16 %v759
    %v796 = vpack.c.b16 %v795, %v795
    %797 = vrot.lane.b32.xlu0 %v796, 88
    %v798 = vpop.permute.xlu0 %797
    %v800 = vsel %vm128, %v793, 0
    %v803 = vsel %vm128, %v798, 0
    %805 = vmatpush.bf16.xpose.msra.mxu0 0
    %806 = vmatpush.bf16.xpose.msra.mxu0 0
    %807 = vmatpush.bf16.xpose.msra.mxu0 0
    %808 = vmatpush.bf16.xpose.msra.mxu0 0
    %809 = vmatpush.bf16.xpose.msra.mxu0 0
    %810 = vmatpush.bf16.xpose.msra.mxu0 0
    %811 = vmatpush.bf16.xpose.msra.mxu0 0
    %812 = vmatpush.bf16.xpose.msra.mxu0 %v803
    %813 = vmatmul.bf16.gmra.mxu0 %v800
    %v814 = vpop.f32.mrf.mxu0
    %v815 = vadd.f32 0.0, %v814
    %v816 = vpop.f32.mrf.mxu0
    %817 = vdwg.mxu0
    %v818 = vmul.f32 %v654, 0.35355338
    %v819 = vmul.f32 %v655, 0.35355338
    %v820 = vmul.f32 %v786, %v818
    %v821 = vmul.f32 %v815, %v819
    %822 = vxpose.xlu0.b32.start [1/16] %v703, 128
    %823 = vxpose.xlu0.b32.cont [2/16] 0.0, 128
    %824 = vxpose.xlu0.b32.cont [3/16] 0.0, 128
    %825 = vxpose.xlu0.b32.cont [4/16] 0.0, 128
    %826 = vxpose.xlu0.b32.cont [5/16] 0.0, 128
    %827 = vxpose.xlu0.b32.cont [6/16] 0.0, 128
    %828 = vxpose.xlu0.b32.cont [7/16] 0.0, 128
    %829 = vxpose.xlu0.b32.cont [8/16] 0.0, 128
    %830 = vxpose.xlu0.b32.cont [9/16] 0.0, 128
    %831 = vxpose.xlu0.b32.cont [10/16] 0.0, 128
    %832 = vxpose.xlu0.b32.cont [11/16] 0.0, 128
    %833 = vxpose.xlu0.b32.cont [12/16] 0.0, 128
    %834 = vxpose.xlu0.b32.cont [13/16] 0.0, 128
    %835 = vxpose.xlu0.b32.cont [14/16] 0.0, 128
    %836 = vxpose.xlu0.b32.cont [15/16] 0.0, 128
    %837 = vxpose.xlu0.b32.end [16/16] 0.0, 128
    %v838 = vpop.trf.xlu0
    %v839 = vpop.trf.xlu0
    %v840 = vpop.trf.xlu0
    %v841 = vpop.trf.xlu0
    %v842 = vpop.trf.xlu0
    %v843 = vpop.trf.xlu0
    %v844 = vpop.trf.xlu0
    %v845 = vpop.trf.xlu0
    %v846 = vpop.trf.xlu0
    %v847 = vpop.trf.xlu0
    %v848 = vpop.trf.xlu0
    %v849 = vpop.trf.xlu0
    %v850 = vpop.trf.xlu0
    %v851 = vpop.trf.xlu0
    %v852 = vpop.trf.xlu0
    %v853 = vpop.trf.xlu0
    %854 = vxpose.xlu0.b32.start [1/16] %v704, 128
    %855 = vxpose.xlu0.b32.cont [2/16] 0.0, 128
    %856 = vxpose.xlu0.b32.cont [3/16] 0.0, 128
    %857 = vxpose.xlu0.b32.cont [4/16] 0.0, 128
    %858 = vxpose.xlu0.b32.cont [5/16] 0.0, 128
    %859 = vxpose.xlu0.b32.cont [6/16] 0.0, 128
    %860 = vxpose.xlu0.b32.cont [7/16] 0.0, 128
    %861 = vxpose.xlu0.b32.cont [8/16] 0.0, 128
    %862 = vxpose.xlu0.b32.cont [9/16] 0.0, 128
    %863 = vxpose.xlu0.b32.cont [10/16] 0.0, 128
    %864 = vxpose.xlu0.b32.cont [11/16] 0.0, 128
    %865 = vxpose.xlu0.b32.cont [12/16] 0.0, 128
    %866 = vxpose.xlu0.b32.cont [13/16] 0.0, 128
    %867 = vxpose.xlu0.b32.cont [14/16] 0.0, 128
    %868 = vxpose.xlu0.b32.cont [15/16] 0.0, 128
    %869 = vxpose.xlu0.b32.end [16/16] 0.0, 128
    %v870 = vpop.trf.xlu0
    %v871 = vpop.trf.xlu0
    %v872 = vpop.trf.xlu0
    %v873 = vpop.trf.xlu0
    %v874 = vpop.trf.xlu0
    %v875 = vpop.trf.xlu0
    %v876 = vpop.trf.xlu0
    %v877 = vpop.trf.xlu0
    %v878 = vpop.trf.xlu0
    %v879 = vpop.trf.xlu0
    %v880 = vpop.trf.xlu0
    %v881 = vpop.trf.xlu0
    %v882 = vpop.trf.xlu0
    %v883 = vpop.trf.xlu0
    %v884 = vpop.trf.xlu0
    %v885 = vpop.trf.xlu0
    %v886 = vperm.slane %v838, 0
    %v887 = vperm.slane %v870, 0
    %v888 = vmul.f32 %v820, %v886
    %v889 = vmul.f32 %v821, %v887
    %v890 = vsel %vm128, %v888, -inf
    %891 = vmax.xlane.f32.xlu0 %v890
    %v892 = vpop.xlane.xlu0 %891
    %v893 = vsel %vm128, %v889, -inf
    %894 = vmax.xlane.f32.xlu0 %v893
    %v895 = vpop.xlane.xlu0 %894
    %v896 = vsub.f32 %v888, %v892
    %v897 = vsub.f32 %v889, %v895
    %v898 = vmul.f32 %v896, 1.442695
    %v899 = vpow.pop %v898
    %v900 = vmul.f32 %v897, 1.442695
    %v901 = vpow.pop %v900
    %v902 = vsel %vm128, %v899, 0.0
    %903 = vadd.xlane.f32.xlu0 %v902
    %v904 = vpop.xlane.xlu0 %903
    %v905 = vsel %vm128, %v901, 0.0
    %906 = vadd.xlane.f32.xlu0 %v905
    %v907 = vpop.xlane.xlu0 %906
    %v908 = vrcp.pop %v904
    %v909 = vmul.f32 %v904, %v908
    %v910 = vsub.f32 1.0, %v909
    %v911 = vmul.f32 %v908, %v910
    %v912 = vadd.f32 %v908, %v911
    %vm913 = vweird.f32 %v904
    %vm914 = vweird.f32 %v908
    %vm915 = vmor %vm913, %vm914
    %v916 = vsel %vm915, %v908, %v912
    %v917 = vand.u32 2147483647, %v904
    %vm918 = vcmp.eq.f32.partialorder %v917, 8.507059e+37
    %v919 = vand.u32 %v904, 2147483648
    %v920 = vor.u32 1.1754944e-38, %v919
    %v921 = vsel %vm918, %v920, %v916
    %v922 = vmul.f32 %v899, %v921
    %v923 = vrcp.pop %v907
    %v924 = vmul.f32 %v907, %v923
    %v925 = vsub.f32 1.0, %v924
    %v926 = vmul.f32 %v923, %v925
    %v927 = vadd.f32 %v923, %v926
    %vm928 = vweird.f32 %v907
    %vm929 = vweird.f32 %v923
    %vm930 = vmor %vm928, %vm929
    %v931 = vsel %vm930, %v923, %v927
    %v932 = vand.u32 2147483647, %v907
    %vm933 = vcmp.eq.f32.partialorder %v932, 8.507059e+37
    %v934 = vand.u32 %v907, 2147483648
    %v935 = vor.u32 1.1754944e-38, %v934
    %v936 = vsel %vm933, %v935, %v931
    %v937 = vmul.f32 %v901, %v936
    %v938 = vand.u32 2147483647, %v922
    %v939 = vand.u32 2147483647, %v937
    %v940 = vsel %vm128, %v938, -inf
    %941 = vmax.xlane.f32.xlu0 %v940
    %v942 = vpop.xlane.xlu0 %941
    %v943 = vsel %vm128, %v939, -inf
    %944 = vmax.xlane.f32.xlu0 %v943
    %v945 = vpop.xlane.xlu0 %944
    %v946 = vmax.f32 %v942, 1e-05
    %v947 = vmax.f32 %v945, 1e-05
    %v948 = vrcp.pop %v946
    %v949 = vmul.f32 %v946, %v948
    %v950 = vsub.f32 1.0, %v949
    %v951 = vmul.f32 %v948, %v950
    %v952 = vadd.f32 %v948, %v951
    %vm953 = vweird.f32 %v946
    %vm954 = vweird.f32 %v948
    %vm955 = vmor %vm953, %vm954
    %v956 = vsel %vm955, %v948, %v952
    %v957 = vand.u32 2147483647, %v946
    %vm958 = vcmp.eq.f32.partialorder %v957, 8.507059e+37
    %v959 = vand.u32 %v946, 2147483648
    %v960 = vor.u32 1.1754944e-38, %v959
    %v961 = vsel %vm958, %v960, %v956
    %v962 = vmul.f32 127.0, %v961
    %v963 = vrcp.pop %v947
    %v964 = vmul.f32 %v947, %v963
    %v965 = vsub.f32 1.0, %v964
    %v966 = vmul.f32 %v963, %v965
    %v967 = vadd.f32 %v963, %v966
    %vm968 = vweird.f32 %v947
    %vm969 = vweird.f32 %v963
    %vm970 = vmor %vm968, %vm969
    %v971 = vsel %vm970, %v963, %v967
    %v972 = vand.u32 2147483647, %v947
    %vm973 = vcmp.eq.f32.partialorder %v972, 8.507059e+37
    %v974 = vand.u32 %v947, 2147483648
    %v975 = vor.u32 1.1754944e-38, %v974
    %v976 = vsel %vm973, %v975, %v971
    %v977 = vmul.f32 127.0, %v976
    %v978 = vmul.f32 %v922, %v962
    %v979 = vmul.f32 %v937, %v977
    %v980 = vround.ne.pseudo %v978
    %v981 = vround.ne.pseudo %v979
    %v982 = vmax.f32 %v980, -128.0
    %v983 = vmax.f32 %v981, -128.0
    %v984 = vmin.f32 %v982, 127.0
    %v985 = vmin.f32 %v983, 127.0
    %v986 = vmul.f32 %v946, 0.007874016
    %v987 = vmul.f32 %v947, 0.007874016
    %v988 = vmul.f32 %v984, %v986
    %v989 = vmul.f32 %v985, %v987
    %991 = vrot.lane.b32.xlu0 %v754, 56
    %v992 = vpop.permute.xlu0 %991
    %v995 = vsel %vm128, %v988, 0
    %997 = vmatpush.msra.mxu0 0.0
    %998 = vmatpush.msra.mxu0 0.0
    %999 = vmatpush.msra.mxu0 0.0
    %1000 = vmatpush.msra.mxu0 0.0
    %1001 = vmatpush.msra.mxu0 0.0
    %1002 = vmatpush.msra.mxu0 0.0
    %1003 = vmatpush.msra.mxu0 0.0
    %1004 = vmatpush.msra.mxu0 0.0
    %1005 = vmatpush.msra.mxu0 0.0
    %1006 = vmatpush.msra.mxu0 0.0
    %1007 = vmatpush.msra.mxu0 0.0
    %1008 = vmatpush.msra.mxu0 0.0
    %1009 = vmatpush.msra.mxu0 0.0
    %1010 = vmatpush.msra.mxu0 0.0
    %1011 = vmatpush.msra.mxu0 0.0
    %1012 = vmatpush.msra.mxu0 %v992
    %1013 = vmatmul.f32.gmra.mxu0 %v995
    %v1014 = vpop.f32.mrf.mxu0
    %v1015 = vadd.f32 0.0, %v1014
    %1016 = vdwg.mxu0
    %1018 = vrot.lane.b32.xlu0 %v755, 56
    %v1019 = vpop.permute.xlu0 %1018
    %v1022 = vsel %vm128, %v989, 0
    %1024 = vmatpush.msra.mxu0 0.0
    %1025 = vmatpush.msra.mxu0 0.0
    %1026 = vmatpush.msra.mxu0 0.0
    %1027 = vmatpush.msra.mxu0 0.0
    %1028 = vmatpush.msra.mxu0 0.0
    %1029 = vmatpush.msra.mxu0 0.0
    %1030 = vmatpush.msra.mxu0 0.0
    %1031 = vmatpush.msra.mxu0 0.0
    %1032 = vmatpush.msra.mxu0 0.0
    %1033 = vmatpush.msra.mxu0 0.0
    %1034 = vmatpush.msra.mxu0 0.0
    %1035 = vmatpush.msra.mxu0 0.0
    %1036 = vmatpush.msra.mxu0 0.0
    %1037 = vmatpush.msra.mxu0 0.0
    %1038 = vmatpush.msra.mxu0 0.0
    %1039 = vmatpush.msra.mxu0 %v1019
    %1040 = vmatmul.f32.gmra.mxu0 %v1022
    %v1041 = vpop.f32.mrf.mxu0
    %v1042 = vadd.f32 0.0, %v1041
    %1043 = vdwg.mxu0
    %v1044 = vand.u32 2147483647, %v1015
    %v1045 = vand.u32 2147483647, %v1042
    %v1046 = vsel %vm128, %v1044, -inf
    %1047 = vmax.xlane.f32.xlu0 %v1046
    %v1048 = vpop.xlane.xlu0 %1047
    %v1049 = vsel %vm128, %v1045, -inf
    %1050 = vmax.xlane.f32.xlu0 %v1049
    %v1051 = vpop.xlane.xlu0 %1050
    %v1052 = vmax.f32 %v1048, 1e-05
    %v1053 = vmax.f32 %v1051, 1e-05
    %v1054 = vrcp.pop %v1052
    %v1055 = vmul.f32 %v1052, %v1054
    %v1056 = vsub.f32 1.0, %v1055
    %v1057 = vmul.f32 %v1054, %v1056
    %v1058 = vadd.f32 %v1054, %v1057
    %vm1059 = vweird.f32 %v1052
    %vm1060 = vweird.f32 %v1054
    %vm1061 = vmor %vm1059, %vm1060
    %v1062 = vsel %vm1061, %v1054, %v1058
    %v1063 = vand.u32 2147483647, %v1052
    %vm1064 = vcmp.eq.f32.partialorder %v1063, 8.507059e+37
    %v1065 = vand.u32 %v1052, 2147483648
    %v1066 = vor.u32 1.1754944e-38, %v1065
    %v1067 = vsel %vm1064, %v1066, %v1062
    %v1068 = vmul.f32 127.0, %v1067
    %v1069 = vrcp.pop %v1053
    %v1070 = vmul.f32 %v1053, %v1069
    %v1071 = vsub.f32 1.0, %v1070
    %v1072 = vmul.f32 %v1069, %v1071
    %v1073 = vadd.f32 %v1069, %v1072
    %vm1074 = vweird.f32 %v1053
    %vm1075 = vweird.f32 %v1069
    %vm1076 = vmor %vm1074, %vm1075
    %v1077 = vsel %vm1076, %v1069, %v1073
    %v1078 = vand.u32 2147483647, %v1053
    %vm1079 = vcmp.eq.f32.partialorder %v1078, 8.507059e+37
    %v1080 = vand.u32 %v1053, 2147483648
    %v1081 = vor.u32 1.1754944e-38, %v1080
    %v1082 = vsel %vm1079, %v1081, %v1077
    %v1083 = vmul.f32 127.0, %v1082
    %v1084 = vmul.f32 %v1015, %v1068
    %v1085 = vmul.f32 %v1042, %v1083
    %v1086 = vround.ne.pseudo %v1084
    %v1087 = vround.ne.pseudo %v1085
    %v1088 = vmax.f32 %v1086, -128.0
    %v1089 = vmax.f32 %v1087, -128.0
    %v1090 = vmin.f32 %v1088, 127.0
    %v1091 = vmin.f32 %v1089, 127.0
    %v1092 = vmul.f32 %v1052, 0.007874016
    %v1093 = vmul.f32 %v1053, 0.007874016
    %v1094 = vmul.f32 %v1090, %v1092
    %v1095 = vmul.f32 %v1091, %v1093
    %vm1096 = vcmask 195712
    %v1097 = vsel %vm1096, %v126, -inf
    %1098 = vmax.xlane.f32.xlu0 %v1097
    %v1099 = vpop.xlane.xlu0 %1098
    %v1100 = vsel %vm1096, %v127, -inf
    %1101 = vmax.xlane.f32.xlu0 %v1100
    %v1102 = vpop.xlane.xlu0 %1101
    %v1103 = vmax.f32 %v1099, 1e-05
    %v1104 = vmax.f32 %v1102, 1e-05
    %v1105 = vrcp.pop %v1103
    %v1106 = vmul.f32 %v1103, %v1105
    %v1107 = vsub.f32 1.0, %v1106
    %v1108 = vmul.f32 %v1105, %v1107
    %v1109 = vadd.f32 %v1105, %v1108
    %vm1110 = vweird.f32 %v1103
    %vm1111 = vweird.f32 %v1105
    %vm1112 = vmor %vm1110, %vm1111
    %v1113 = vsel %vm1112, %v1105, %v1109
    %v1114 = vand.u32 2147483647, %v1103
    %vm1115 = vcmp.eq.f32.partialorder %v1114, 8.507059e+37
    %v1116 = vand.u32 %v1103, 2147483648
    %v1117 = vor.u32 1.1754944e-38, %v1116
    %v1118 = vsel %vm1115, %v1117, %v1113
    %v1119 = vmul.f32 127.0, %v1118
    %v1120 = vrcp.pop %v1104
    %v1121 = vmul.f32 %v1104, %v1120
    %v1122 = vsub.f32 1.0, %v1121
    %v1123 = vmul.f32 %v1120, %v1122
    %v1124 = vadd.f32 %v1120, %v1123
    %vm1125 = vweird.f32 %v1104
    %vm1126 = vweird.f32 %v1120
    %vm1127 = vmor %vm1125, %vm1126
    %v1128 = vsel %vm1127, %v1120, %v1124
    %v1129 = vand.u32 2147483647, %v1104
    %vm1130 = vcmp.eq.f32.partialorder %v1129, 8.507059e+37
    %v1131 = vand.u32 %v1104, 2147483648
    %v1132 = vor.u32 1.1754944e-38, %v1131
    %v1133 = vsel %vm1130, %v1132, %v1128
    %v1134 = vmul.f32 127.0, %v1133
    %v1135 = vmul.f32 %v124, %v1119
    %v1136 = vmul.f32 %v125, %v1134
    %v1137 = vround.ne.pseudo %v1135
    %v1138 = vround.ne.pseudo %v1136
    %v1139 = vmax.f32 %v1137, -128.0
    %v1140 = vmax.f32 %v1138, -128.0
    %v1141 = vmin.f32 %v1139, 127.0
    %v1142 = vmin.f32 %v1140, 127.0
    %v1143 = vmul.f32 %v1103, 0.007874016
    %v1144 = vmul.f32 %v1104, 0.007874016
    %vm1145 = vcmask 458112
    %v1146 = vsel %vm1145, %v126, -inf
    %1147 = vmax.xlane.f32.xlu0 %v1146
    %v1148 = vpop.xlane.xlu0 %1147
    %v1149 = vsel %vm1145, %v127, -inf
    %1150 = vmax.xlane.f32.xlu0 %v1149
    %v1151 = vpop.xlane.xlu0 %1150
    %v1152 = vmax.f32 %v1148, 1e-05
    %v1153 = vmax.f32 %v1151, 1e-05
    %v1154 = vrcp.pop %v1152
    %v1155 = vmul.f32 %v1152, %v1154
    %v1156 = vsub.f32 1.0, %v1155
    %v1157 = vmul.f32 %v1154, %v1156
    %v1158 = vadd.f32 %v1154, %v1157
    %vm1159 = vweird.f32 %v1152
    %vm1160 = vweird.f32 %v1154
    %vm1161 = vmor %vm1159, %vm1160
    %v1162 = vsel %vm1161, %v1154, %v1158
    %v1163 = vand.u32 2147483647, %v1152
    %vm1164 = vcmp.eq.f32.partialorder %v1163, 8.507059e+37
    %v1165 = vand.u32 %v1152, 2147483648
    %v1166 = vor.u32 1.1754944e-38, %v1165
    %v1167 = vsel %vm1164, %v1166, %v1162
    %v1168 = vmul.f32 127.0, %v1167
    %v1169 = vrcp.pop %v1153
    %v1170 = vmul.f32 %v1153, %v1169
    %v1171 = vsub.f32 1.0, %v1170
    %v1172 = vmul.f32 %v1169, %v1171
    %v1173 = vadd.f32 %v1169, %v1172
    %vm1174 = vweird.f32 %v1153
    %vm1175 = vweird.f32 %v1169
    %vm1176 = vmor %vm1174, %vm1175
    %v1177 = vsel %vm1176, %v1169, %v1173
    %v1178 = vand.u32 2147483647, %v1153
    %vm1179 = vcmp.eq.f32.partialorder %v1178, 8.507059e+37
    %v1180 = vand.u32 %v1153, 2147483648
    %v1181 = vor.u32 1.1754944e-38, %v1180
    %v1182 = vsel %vm1179, %v1181, %v1177
    %v1183 = vmul.f32 127.0, %v1182
    %v1184 = vmul.f32 %v124, %v1168
    %v1185 = vmul.f32 %v125, %v1183
    %v1186 = vround.ne.pseudo %v1184
    %v1187 = vround.ne.pseudo %v1185
    %v1188 = vmax.f32 %v1186, -128.0
    %v1189 = vmax.f32 %v1187, -128.0
    %v1190 = vmin.f32 %v1188, 127.0
    %v1191 = vmin.f32 %v1189, 127.0
    %v1192 = vmul.f32 %v1152, 0.007874016
    %v1193 = vmul.f32 %v1153, 0.007874016
    %vm1194 = vcmask 720512
    %v1195 = vsel %vm1194, %v126, -inf
    %1196 = vmax.xlane.f32.xlu0 %v1195
    %v1197 = vpop.xlane.xlu0 %1196
    %v1198 = vsel %vm1194, %v127, -inf
    %1199 = vmax.xlane.f32.xlu0 %v1198
    %v1200 = vpop.xlane.xlu0 %1199
    %v1201 = vmax.f32 %v1197, 1e-05
    %v1202 = vmax.f32 %v1200, 1e-05
    %v1203 = vrcp.pop %v1201
    %v1204 = vmul.f32 %v1201, %v1203
    %v1205 = vsub.f32 1.0, %v1204
    %v1206 = vmul.f32 %v1203, %v1205
    %v1207 = vadd.f32 %v1203, %v1206
    %vm1208 = vweird.f32 %v1201
    %vm1209 = vweird.f32 %v1203
    %vm1210 = vmor %vm1208, %vm1209
    %v1211 = vsel %vm1210, %v1203, %v1207
    %v1212 = vand.u32 2147483647, %v1201
    %vm1213 = vcmp.eq.f32.partialorder %v1212, 8.507059e+37
    %v1214 = vand.u32 %v1201, 2147483648
    %v1215 = vor.u32 1.1754944e-38, %v1214
    %v1216 = vsel %vm1213, %v1215, %v1211
    %v1217 = vmul.f32 127.0, %v1216
    %v1218 = vrcp.pop %v1202
    %v1219 = vmul.f32 %v1202, %v1218
    %v1220 = vsub.f32 1.0, %v1219
    %v1221 = vmul.f32 %v1218, %v1220
    %v1222 = vadd.f32 %v1218, %v1221
    %vm1223 = vweird.f32 %v1202
    %vm1224 = vweird.f32 %v1218
    %vm1225 = vmor %vm1223, %vm1224
    %v1226 = vsel %vm1225, %v1218, %v1222
    %v1227 = vand.u32 2147483647, %v1202
    %vm1228 = vcmp.eq.f32.partialorder %v1227, 8.507059e+37
    %v1229 = vand.u32 %v1202, 2147483648
    %v1230 = vor.u32 1.1754944e-38, %v1229
    %v1231 = vsel %vm1228, %v1230, %v1226
    %v1232 = vmul.f32 127.0, %v1231
    %v1233 = vmul.f32 %v124, %v1217
    %v1234 = vmul.f32 %v125, %v1232
    %v1235 = vround.ne.pseudo %v1233
    %v1236 = vround.ne.pseudo %v1234
    %v1237 = vmax.f32 %v1235, -128.0
    %v1238 = vmax.f32 %v1236, -128.0
    %v1239 = vmin.f32 %v1237, 127.0
    %v1240 = vmin.f32 %v1238, 127.0
    %v1241 = vmul.f32 %v1201, 0.007874016
    %v1242 = vmul.f32 %v1202, 0.007874016
    %v1243 = vmul.f32 %v1239, %v1241
    %v1244 = vmul.f32 %v1240, %v1242
    %v1245 = vpack.c.bf16 %v1141, %v1141
    %v1246 = vpack.c.bf16 %v1142, %v1142
    %v1247 = vpack.c.bf16 %v1190, %v1190
    %v1248 = vpack.c.bf16 %v1191, %v1191
    %v1250 = vunpack.c.l.b16 %v1245
    %v1251 = vpack.c.b16 %v1250, %v1250
    %1252 = vrot.lane.b32.xlu0 %v1251, 112
    %v1253 = vpop.permute.xlu0 %1252
    %v1255 = vunpack.c.l.b16 %v1247
    %v1256 = vpack.c.b16 %v1255, %v1255
    %1257 = vrot.lane.b32.xlu0 %v1256, 80
    %v1258 = vpop.permute.xlu0 %1257
    %v1260 = vsel %vm128, %v1253, 0
    %v1263 = vsel %vm128, %v1258, 0
    %1265 = vmatpush.bf16.xpose.msra.mxu0 0
    %1266 = vmatpush.bf16.xpose.msra.mxu0 0
    %1267 = vmatpush.bf16.xpose.msra.mxu0 0
    %1268 = vmatpush.bf16.xpose.msra.mxu0 0
    %1269 = vmatpush.bf16.xpose.msra.mxu0 0
    %1270 = vmatpush.bf16.xpose.msra.mxu0 0
    %1271 = vmatpush.bf16.xpose.msra.mxu0 0
    %1272 = vmatpush.bf16.xpose.msra.mxu0 %v1263
    %1273 = vmatmul.bf16.gmra.mxu0 %v1260
    %v1274 = vpop.f32.mrf.mxu0
    %v1275 = vadd.f32 0.0, %v1274
    %v1276 = vpop.f32.mrf.mxu0
    %1277 = vdwg.mxu0
    %v1279 = vunpack.c.l.b16 %v1246
    %v1280 = vpack.c.b16 %v1279, %v1279
    %1281 = vrot.lane.b32.xlu0 %v1280, 112
    %v1282 = vpop.permute.xlu0 %1281
    %v1284 = vunpack.c.l.b16 %v1248
    %v1285 = vpack.c.b16 %v1284, %v1284
    %1286 = vrot.lane.b32.xlu0 %v1285, 80
    %v1287 = vpop.permute.xlu0 %1286
    %v1289 = vsel %vm128, %v1282, 0
    %v1292 = vsel %vm128, %v1287, 0
    %1294 = vmatpush.bf16.xpose.msra.mxu0 0
    %1295 = vmatpush.bf16.xpose.msra.mxu0 0
    %1296 = vmatpush.bf16.xpose.msra.mxu0 0
    %1297 = vmatpush.bf16.xpose.msra.mxu0 0
    %1298 = vmatpush.bf16.xpose.msra.mxu0 0
    %1299 = vmatpush.bf16.xpose.msra.mxu0 0
    %1300 = vmatpush.bf16.xpose.msra.mxu0 0
    %1301 = vmatpush.bf16.xpose.msra.mxu0 %v1292
    %1302 = vmatmul.bf16.gmra.mxu0 %v1289
    %v1303 = vpop.f32.mrf.mxu0
    %v1304 = vadd.f32 0.0, %v1303
    %v1305 = vpop.f32.mrf.mxu0
    %1306 = vdwg.mxu0
    %v1307 = vmul.f32 %v1143, 0.35355338
    %v1308 = vmul.f32 %v1144, 0.35355338
    %v1309 = vmul.f32 %v1275, %v1307
    %v1310 = vmul.f32 %v1304, %v1308
    %1311 = vxpose.xlu0.b32.start [1/16] %v1192, 128
    %1312 = vxpose.xlu0.b32.cont [2/16] 0.0, 128
    %1313 = vxpose.xlu0.b32.cont [3/16] 0.0, 128
    %1314 = vxpose.xlu0.b32.cont [4/16] 0.0, 128
    %1315 = vxpose.xlu0.b32.cont [5/16] 0.0, 128
    %1316 = vxpose.xlu0.b32.cont [6/16] 0.0, 128
    %1317 = vxpose.xlu0.b32.cont [7/16] 0.0, 128
    %1318 = vxpose.xlu0.b32.cont [8/16] 0.0, 128
    %1319 = vxpose.xlu0.b32.cont [9/16] 0.0, 128
    %1320 = vxpose.xlu0.b32.cont [10/16] 0.0, 128
    %1321 = vxpose.xlu0.b32.cont [11/16] 0.0, 128
    %1322 = vxpose.xlu0.b32.cont [12/16] 0.0, 128
    %1323 = vxpose.xlu0.b32.cont [13/16] 0.0, 128
    %1324 = vxpose.xlu0.b32.cont [14/16] 0.0, 128
    %1325 = vxpose.xlu0.b32.cont [15/16] 0.0, 128
    %1326 = vxpose.xlu0.b32.end [16/16] 0.0, 128
    %v1327 = vpop.trf.xlu0
    %v1328 = vpop.trf.xlu0
    %v1329 = vpop.trf.xlu0
    %v1330 = vpop.trf.xlu0
    %v1331 = vpop.trf.xlu0
    %v1332 = vpop.trf.xlu0
    %v1333 = vpop.trf.xlu0
    %v1334 = vpop.trf.xlu0
    %v1335 = vpop.trf.xlu0
    %v1336 = vpop.trf.xlu0
    %v1337 = vpop.trf.xlu0
    %v1338 = vpop.trf.xlu0
    %v1339 = vpop.trf.xlu0
    %v1340 = vpop.trf.xlu0
    %v1341 = vpop.trf.xlu0
    %v1342 = vpop.trf.xlu0
    %1343 = vxpose.xlu0.b32.start [1/16] %v1193, 128
    %1344 = vxpose.xlu0.b32.cont [2/16] 0.0, 128
    %1345 = vxpose.xlu0.b32.cont [3/16] 0.0, 128
    %1346 = vxpose.xlu0.b32.cont [4/16] 0.0, 128
    %1347 = vxpose.xlu0.b32.cont [5/16] 0.0, 128
    %1348 = vxpose.xlu0.b32.cont [6/16] 0.0, 128
    %1349 = vxpose.xlu0.b32.cont [7/16] 0.0, 128
    %1350 = vxpose.xlu0.b32.cont [8/16] 0.0, 128
    %1351 = vxpose.xlu0.b32.cont [9/16] 0.0, 128
    %1352 = vxpose.xlu0.b32.cont [10/16] 0.0, 128
    %1353 = vxpose.xlu0.b32.cont [11/16] 0.0, 128
    %1354 = vxpose.xlu0.b32.cont [12/16] 0.0, 128
    %1355 = vxpose.xlu0.b32.cont [13/16] 0.0, 128
    %1356 = vxpose.xlu0.b32.cont [14/16] 0.0, 128
    %1357 = vxpose.xlu0.b32.cont [15/16] 0.0, 128
    %1358 = vxpose.xlu0.b32.end [16/16] 0.0, 128
    %v1359 = vpop.trf.xlu0
    %v1360 = vpop.trf.xlu0
    %v1361 = vpop.trf.xlu0
    %v1362 = vpop.trf.xlu0
    %v1363 = vpop.trf.xlu0
    %v1364 = vpop.trf.xlu0
    %v1365 = vpop.trf.xlu0
    %v1366 = vpop.trf.xlu0
    %v1367 = vpop.trf.xlu0
    %v1368 = vpop.trf.xlu0
    %v1369 = vpop.trf.xlu0
    %v1370 = vpop.trf.xlu0
    %v1371 = vpop.trf.xlu0
    %v1372 = vpop.trf.xlu0
    %v1373 = vpop.trf.xlu0
    %v1374 = vpop.trf.xlu0
    %v1375 = vperm.slane %v1327, 0
    %v1376 = vperm.slane %v1359, 0
    %v1377 = vmul.f32 %v1309, %v1375
    %v1378 = vmul.f32 %v1310, %v1376
    %v1379 = vsel %vm128, %v1377, -inf
    %1380 = vmax.xlane.f32.xlu0 %v1379
    %v1381 = vpop.xlane.xlu0 %1380
    %v1382 = vsel %vm128, %v1378, -inf
    %1383 = vmax.xlane.f32.xlu0 %v1382
    %v1384 = vpop.xlane.xlu0 %1383
    %v1385 = vsub.f32 %v1377, %v1381
    %v1386 = vsub.f32 %v1378, %v1384
    %v1387 = vmul.f32 %v1385, 1.442695
    %v1388 = vpow.pop %v1387
    %v1389 = vmul.f32 %v1386, 1.442695
    %v1390 = vpow.pop %v1389
    %v1391 = vsel %vm128, %v1388, 0.0
    %1392 = vadd.xlane.f32.xlu0 %v1391
    %v1393 = vpop.xlane.xlu0 %1392
    %v1394 = vsel %vm128, %v1390, 0.0
    %1395 = vadd.xlane.f32.xlu0 %v1394
    %v1396 = vpop.xlane.xlu0 %1395
    %v1397 = vrcp.pop %v1393
    %v1398 = vmul.f32 %v1393, %v1397
    %v1399 = vsub.f32 1.0, %v1398
    %v1400 = vmul.f32 %v1397, %v1399
    %v1401 = vadd.f32 %v1397, %v1400
    %vm1402 = vweird.f32 %v1393
    %vm1403 = vweird.f32 %v1397
    %vm1404 = vmor %vm1402, %vm1403
    %v1405 = vsel %vm1404, %v1397, %v1401
    %v1406 = vand.u32 2147483647, %v1393
    %vm1407 = vcmp.eq.f32.partialorder %v1406, 8.507059e+37
    %v1408 = vand.u32 %v1393, 2147483648
    %v1409 = vor.u32 1.1754944e-38, %v1408
    %v1410 = vsel %vm1407, %v1409, %v1405
    %v1411 = vmul.f32 %v1388, %v1410
    %v1412 = vrcp.pop %v1396
    %v1413 = vmul.f32 %v1396, %v1412
    %v1414 = vsub.f32 1.0, %v1413
    %v1415 = vmul.f32 %v1412, %v1414
    %v1416 = vadd.f32 %v1412, %v1415
    %vm1417 = vweird.f32 %v1396
    %vm1418 = vweird.f32 %v1412
    %vm1419 = vmor %vm1417, %vm1418
    %v1420 = vsel %vm1419, %v1412, %v1416
    %v1421 = vand.u32 2147483647, %v1396
    %vm1422 = vcmp.eq.f32.partialorder %v1421, 8.507059e+37
    %v1423 = vand.u32 %v1396, 2147483648
    %v1424 = vor.u32 1.1754944e-38, %v1423
    %v1425 = vsel %vm1422, %v1424, %v1420
    %v1426 = vmul.f32 %v1390, %v1425
    %v1427 = vand.u32 2147483647, %v1411
    %v1428 = vand.u32 2147483647, %v1426
    %v1429 = vsel %vm128, %v1427, -inf
    %1430 = vmax.xlane.f32.xlu0 %v1429
    %v1431 = vpop.xlane.xlu0 %1430
    %v1432 = vsel %vm128, %v1428, -inf
    %1433 = vmax.xlane.f32.xlu0 %v1432
    %v1434 = vpop.xlane.xlu0 %1433
    %v1435 = vmax.f32 %v1431, 1e-05
    %v1436 = vmax.f32 %v1434, 1e-05
    %v1437 = vrcp.pop %v1435
    %v1438 = vmul.f32 %v1435, %v1437
    %v1439 = vsub.f32 1.0, %v1438
    %v1440 = vmul.f32 %v1437, %v1439
    %v1441 = vadd.f32 %v1437, %v1440
    %vm1442 = vweird.f32 %v1435
    %vm1443 = vweird.f32 %v1437
    %vm1444 = vmor %vm1442, %vm1443
    %v1445 = vsel %vm1444, %v1437, %v1441
    %v1446 = vand.u32 2147483647, %v1435
    %vm1447 = vcmp.eq.f32.partialorder %v1446, 8.507059e+37
    %v1448 = vand.u32 %v1435, 2147483648
    %v1449 = vor.u32 1.1754944e-38, %v1448
    %v1450 = vsel %vm1447, %v1449, %v1445
    %v1451 = vmul.f32 127.0, %v1450
    %v1452 = vrcp.pop %v1436
    %v1453 = vmul.f32 %v1436, %v1452
    %v1454 = vsub.f32 1.0, %v1453
    %v1455 = vmul.f32 %v1452, %v1454
    %v1456 = vadd.f32 %v1452, %v1455
    %vm1457 = vweird.f32 %v1436
    %vm1458 = vweird.f32 %v1452
    %vm1459 = vmor %vm1457, %vm1458
    %v1460 = vsel %vm1459, %v1452, %v1456
    %v1461 = vand.u32 2147483647, %v1436
    %vm1462 = vcmp.eq.f32.partialorder %v1461, 8.507059e+37
    %v1463 = vand.u32 %v1436, 2147483648
    %v1464 = vor.u32 1.1754944e-38, %v1463
    %v1465 = vsel %vm1462, %v1464, %v1460
    %v1466 = vmul.f32 127.0, %v1465
    %v1467 = vmul.f32 %v1411, %v1451
    %v1468 = vmul.f32 %v1426, %v1466
    %v1469 = vround.ne.pseudo %v1467
    %v1470 = vround.ne.pseudo %v1468
    %v1471 = vmax.f32 %v1469, -128.0
    %v1472 = vmax.f32 %v1470, -128.0
    %v1473 = vmin.f32 %v1471, 127.0
    %v1474 = vmin.f32 %v1472, 127.0
    %v1475 = vmul.f32 %v1435, 0.007874016
    %v1476 = vmul.f32 %v1436, 0.007874016
    %v1477 = vmul.f32 %v1473, %v1475
    %v1478 = vmul.f32 %v1474, %v1476
    %1480 = vrot.lane.b32.xlu0 %v1243, 48
    %v1481 = vpop.permute.xlu0 %1480
    %v1484 = vsel %vm128, %v1477, 0
    %1486 = vmatpush.msra.mxu0 0.0
    %1487 = vmatpush.msra.mxu0 0.0
    %1488 = vmatpush.msra.mxu0 0.0
    %1489 = vmatpush.msra.mxu0 0.0
    %1490 = vmatpush.msra.mxu0 0.0
    %1491 = vmatpush.msra.mxu0 0.0
    %1492 = vmatpush.msra.mxu0 0.0
    %1493 = vmatpush.msra.mxu0 0.0
    %1494 = vmatpush.msra.mxu0 0.0
    %1495 = vmatpush.msra.mxu0 0.0
    %1496 = vmatpush.msra.mxu0 0.0
    %1497 = vmatpush.msra.mxu0 0.0
    %1498 = vmatpush.msra.mxu0 0.0
    %1499 = vmatpush.msra.mxu0 0.0
    %1500 = vmatpush.msra.mxu0 0.0
    %1501 = vmatpush.msra.mxu0 %v1481
    %1502 = vmatmul.f32.gmra.mxu0 %v1484
    %v1503 = vpop.f32.mrf.mxu0
    %v1504 = vadd.f32 0.0, %v1503
    %1505 = vdwg.mxu0
    %1507 = vrot.lane.b32.xlu0 %v1244, 48
    %v1508 = vpop.permute.xlu0 %1507
    %v1511 = vsel %vm128, %v1478, 0
    %1513 = vmatpush.msra.mxu0 0.0
    %1514 = vmatpush.msra.mxu0 0.0
    %1515 = vmatpush.msra.mxu0 0.0
    %1516 = vmatpush.msra.mxu0 0.0
    %1517 = vmatpush.msra.mxu0 0.0
    %1518 = vmatpush.msra.mxu0 0.0
    %1519 = vmatpush.msra.mxu0 0.0
    %1520 = vmatpush.msra.mxu0 0.0
    %1521 = vmatpush.msra.mxu0 0.0
    %1522 = vmatpush.msra.mxu0 0.0
    %1523 = vmatpush.msra.mxu0 0.0
    %1524 = vmatpush.msra.mxu0 0.0
    %1525 = vmatpush.msra.mxu0 0.0
    %1526 = vmatpush.msra.mxu0 0.0
    %1527 = vmatpush.msra.mxu0 0.0
    %1528 = vmatpush.msra.mxu0 %v1508
    %1529 = vmatmul.f32.gmra.mxu0 %v1511
    %v1530 = vpop.f32.mrf.mxu0
    %v1531 = vadd.f32 0.0, %v1530
    %1532 = vdwg.mxu0
    %v1533 = vand.u32 2147483647, %v1504
    %v1534 = vand.u32 2147483647, %v1531
    %v1535 = vsel %vm128, %v1533, -inf
    %1536 = vmax.xlane.f32.xlu0 %v1535
    %v1537 = vpop.xlane.xlu0 %1536
    %v1538 = vsel %vm128, %v1534, -inf
    %1539 = vmax.xlane.f32.xlu0 %v1538
    %v1540 = vpop.xlane.xlu0 %1539
    %v1541 = vmax.f32 %v1537, 1e-05
    %v1542 = vmax.f32 %v1540, 1e-05
    %v1543 = vrcp.pop %v1541
    %v1544 = vmul.f32 %v1541, %v1543
    %v1545 = vsub.f32 1.0, %v1544
    %v1546 = vmul.f32 %v1543, %v1545
    %v1547 = vadd.f32 %v1543, %v1546
    %vm1548 = vweird.f32 %v1541
    %vm1549 = vweird.f32 %v1543
    %vm1550 = vmor %vm1548, %vm1549
    %v1551 = vsel %vm1550, %v1543, %v1547
    %v1552 = vand.u32 2147483647, %v1541
    %vm1553 = vcmp.eq.f32.partialorder %v1552, 8.507059e+37
    %v1554 = vand.u32 %v1541, 2147483648
    %v1555 = vor.u32 1.1754944e-38, %v1554
    %v1556 = vsel %vm1553, %v1555, %v1551
    %v1557 = vmul.f32 127.0, %v1556
    %v1558 = vrcp.pop %v1542
    %v1559 = vmul.f32 %v1542, %v1558
    %v1560 = vsub.f32 1.0, %v1559
    %v1561 = vmul.f32 %v1558, %v1560
    %v1562 = vadd.f32 %v1558, %v1561
    %vm1563 = vweird.f32 %v1542
    %vm1564 = vweird.f32 %v1558
    %vm1565 = vmor %vm1563, %vm1564
    %v1566 = vsel %vm1565, %v1558, %v1562
    %v1567 = vand.u32 2147483647, %v1542
    %vm1568 = vcmp.eq.f32.partialorder %v1567, 8.507059e+37
    %v1569 = vand.u32 %v1542, 2147483648
    %v1570 = vor.u32 1.1754944e-38, %v1569
    %v1571 = vsel %vm1568, %v1570, %v1566
    %v1572 = vmul.f32 127.0, %v1571
    %v1573 = vmul.f32 %v1504, %v1557
    %v1574 = vmul.f32 %v1531, %v1572
    %v1575 = vround.ne.pseudo %v1573
    %v1576 = vround.ne.pseudo %v1574
    %v1577 = vmax.f32 %v1575, -128.0
    %v1578 = vmax.f32 %v1576, -128.0
    %v1579 = vmin.f32 %v1577, 127.0
    %v1580 = vmin.f32 %v1578, 127.0
    %v1581 = vmul.f32 %v1541, 0.007874016
    %v1582 = vmul.f32 %v1542, 0.007874016
    %v1583 = vmul.f32 %v1579, %v1581
    %v1584 = vmul.f32 %v1580, %v1582
    %vm1585 = vcmask 261312
    %v1586 = vsel %vm1585, %v126, -inf
    %1587 = vmax.xlane.f32.xlu0 %v1586
    %v1588 = vpop.xlane.xlu0 %1587
    %v1589 = vsel %vm1585, %v127, -inf
    %1590 = vmax.xlane.f32.xlu0 %v1589
    %v1591 = vpop.xlane.xlu0 %1590
    %v1592 = vmax.f32 %v1588, 1e-05
    %v1593 = vmax.f32 %v1591, 1e-05
    %v1594 = vrcp.pop %v1592
    %v1595 = vmul.f32 %v1592, %v1594
    %v1596 = vsub.f32 1.0, %v1595
    %v1597 = vmul.f32 %v1594, %v1596
    %v1598 = vadd.f32 %v1594, %v1597
    %vm1599 = vweird.f32 %v1592
    %vm1600 = vweird.f32 %v1594
    %vm1601 = vmor %vm1599, %vm1600
    %v1602 = vsel %vm1601, %v1594, %v1598
    %v1603 = vand.u32 2147483647, %v1592
    %vm1604 = vcmp.eq.f32.partialorder %v1603, 8.507059e+37
    %v1605 = vand.u32 %v1592, 2147483648
    %v1606 = vor.u32 1.1754944e-38, %v1605
    %v1607 = vsel %vm1604, %v1606, %v1602
    %v1608 = vmul.f32 127.0, %v1607
    %v1609 = vrcp.pop %v1593
    %v1610 = vmul.f32 %v1593, %v1609
    %v1611 = vsub.f32 1.0, %v1610
    %v1612 = vmul.f32 %v1609, %v1611
    %v1613 = vadd.f32 %v1609, %v1612
    %vm1614 = vweird.f32 %v1593
    %vm1615 = vweird.f32 %v1609
    %vm1616 = vmor %vm1614, %vm1615
    %v1617 = vsel %vm1616, %v1609, %v1613
    %v1618 = vand.u32 2147483647, %v1593
    %vm1619 = vcmp.eq.f32.partialorder %v1618, 8.507059e+37
    %v1620 = vand.u32 %v1593, 2147483648
    %v1621 = vor.u32 1.1754944e-38, %v1620
    %v1622 = vsel %vm1619, %v1621, %v1617
    %v1623 = vmul.f32 127.0, %v1622
    %v1624 = vmul.f32 %v124, %v1608
    %v1625 = vmul.f32 %v125, %v1623
    %v1626 = vround.ne.pseudo %v1624
    %v1627 = vround.ne.pseudo %v1625
    %v1628 = vmax.f32 %v1626, -128.0
    %v1629 = vmax.f32 %v1627, -128.0
    %v1630 = vmin.f32 %v1628, 127.0
    %v1631 = vmin.f32 %v1629, 127.0
    %v1632 = vmul.f32 %v1592, 0.007874016
    %v1633 = vmul.f32 %v1593, 0.007874016
    %vm1634 = vcmask 523712
    %v1635 = vsel %vm1634, %v126, -inf
    %1636 = vmax.xlane.f32.xlu0 %v1635
    %v1637 = vpop.xlane.xlu0 %1636
    %v1638 = vsel %vm1634, %v127, -inf
    %1639 = vmax.xlane.f32.xlu0 %v1638
    %v1640 = vpop.xlane.xlu0 %1639
    %v1641 = vmax.f32 %v1637, 1e-05
    %v1642 = vmax.f32 %v1640, 1e-05
    %v1643 = vrcp.pop %v1641
    %v1644 = vmul.f32 %v1641, %v1643
    %v1645 = vsub.f32 1.0, %v1644
    %v1646 = vmul.f32 %v1643, %v1645
    %v1647 = vadd.f32 %v1643, %v1646
    %vm1648 = vweird.f32 %v1641
    %vm1649 = vweird.f32 %v1643
    %vm1650 = vmor %vm1648, %vm1649
    %v1651 = vsel %vm1650, %v1643, %v1647
    %v1652 = vand.u32 2147483647, %v1641
    %vm1653 = vcmp.eq.f32.partialorder %v1652, 8.507059e+37
    %v1654 = vand.u32 %v1641, 2147483648
    %v1655 = vor.u32 1.1754944e-38, %v1654
    %v1656 = vsel %vm1653, %v1655, %v1651
    %v1657 = vmul.f32 127.0, %v1656
    %v1658 = vrcp.pop %v1642
    %v1659 = vmul.f32 %v1642, %v1658
    %v1660 = vsub.f32 1.0, %v1659
    %v1661 = vmul.f32 %v1658, %v1660
    %v1662 = vadd.f32 %v1658, %v1661
    %vm1663 = vweird.f32 %v1642
    %vm1664 = vweird.f32 %v1658
    %vm1665 = vmor %vm1663, %vm1664
    %v1666 = vsel %vm1665, %v1658, %v1662
    %v1667 = vand.u32 2147483647, %v1642
    %vm1668 = vcmp.eq.f32.partialorder %v1667, 8.507059e+37
    %v1669 = vand.u32 %v1642, 2147483648
    %v1670 = vor.u32 1.1754944e-38, %v1669
    %v1671 = vsel %vm1668, %v1670, %v1666
    %v1672 = vmul.f32 127.0, %v1671
    %v1673 = vmul.f32 %v124, %v1657
    %v1674 = vmul.f32 %v125, %v1672
    %v1675 = vround.ne.pseudo %v1673
    %v1676 = vround.ne.pseudo %v1674
    %v1677 = vmax.f32 %v1675, -128.0
    %v1678 = vmax.f32 %v1676, -128.0
    %v1679 = vmin.f32 %v1677, 127.0
    %v1680 = vmin.f32 %v1678, 127.0
    %v1681 = vmul.f32 %v1641, 0.007874016
    %v1682 = vmul.f32 %v1642, 0.007874016
    %vm1683 = vcmask 786112
    %v1684 = vsel %vm1683, %v126, -inf
    %1685 = vmax.xlane.f32.xlu0 %v1684
    %v1686 = vpop.xlane.xlu0 %1685
    %v1687 = vsel %vm1683, %v127, -inf
    %1688 = vmax.xlane.f32.xlu0 %v1687
    %v1689 = vpop.xlane.xlu0 %1688
    %v1690 = vmax.f32 %v1686, 1e-05
    %v1691 = vmax.f32 %v1689, 1e-05
    %v1692 = vrcp.pop %v1690
    %v1693 = vmul.f32 %v1690, %v1692
    %v1694 = vsub.f32 1.0, %v1693
    %v1695 = vmul.f32 %v1692, %v1694
    %v1696 = vadd.f32 %v1692, %v1695
    %vm1697 = vweird.f32 %v1690
    %vm1698 = vweird.f32 %v1692
    %vm1699 = vmor %vm1697, %vm1698
    %v1700 = vsel %vm1699, %v1692, %v1696
    %v1701 = vand.u32 2147483647, %v1690
    %vm1702 = vcmp.eq.f32.partialorder %v1701, 8.507059e+37
    %v1703 = vand.u32 %v1690, 2147483648
    %v1704 = vor.u32 1.1754944e-38, %v1703
    %v1705 = vsel %vm1702, %v1704, %v1700
    %v1706 = vmul.f32 127.0, %v1705
    %v1707 = vrcp.pop %v1691
    %v1708 = vmul.f32 %v1691, %v1707
    %v1709 = vsub.f32 1.0, %v1708
    %v1710 = vmul.f32 %v1707, %v1709
    %v1711 = vadd.f32 %v1707, %v1710
    %vm1712 = vweird.f32 %v1691
    %vm1713 = vweird.f32 %v1707
    %vm1714 = vmor %vm1712, %vm1713
    %v1715 = vsel %vm1714, %v1707, %v1711
    %v1716 = vand.u32 2147483647, %v1691
    %vm1717 = vcmp.eq.f32.partialorder %v1716, 8.507059e+37
    %v1718 = vand.u32 %v1691, 2147483648
    %v1719 = vor.u32 1.1754944e-38, %v1718
    %v1720 = vsel %vm1717, %v1719, %v1715
    %v1721 = vmul.f32 127.0, %v1720
    %v1722 = vmul.f32 %v124, %v1706
    %v1723 = vmul.f32 %v125, %v1721
    %v1724 = vround.ne.pseudo %v1722
    %v1725 = vround.ne.pseudo %v1723
    %v1726 = vmax.f32 %v1724, -128.0
    %v1727 = vmax.f32 %v1725, -128.0
    %v1728 = vmin.f32 %v1726, 127.0
    %v1729 = vmin.f32 %v1727, 127.0
    %v1730 = vmul.f32 %v1690, 0.007874016
    %v1731 = vmul.f32 %v1691, 0.007874016
    %v1732 = vmul.f32 %v1728, %v1730
    %v1733 = vmul.f32 %v1729, %v1731
    %v1734 = vpack.c.bf16 %v1630, %v1630
    %v1735 = vpack.c.bf16 %v1631, %v1631
    %v1736 = vpack.c.bf16 %v1679, %v1679
    %v1737 = vpack.c.bf16 %v1680, %v1680
    %v1739 = vunpack.c.l.b16 %v1734
    %v1740 = vpack.c.b16 %v1739, %v1739
    %1741 = vrot.lane.b32.xlu0 %v1740, 104
    %v1742 = vpop.permute.xlu0 %1741
    %v1744 = vunpack.c.l.b16 %v1736
    %v1745 = vpack.c.b16 %v1744, %v1744
    %1746 = vrot.lane.b32.xlu0 %v1745, 72
    %v1747 = vpop.permute.xlu0 %1746
    %v1749 = vsel %vm128, %v1742, 0
    %v1752 = vsel %vm128, %v1747, 0
    %1754 = vmatpush.bf16.xpose.msra.mxu0 0
    %1755 = vmatpush.bf16.xpose.msra.mxu0 0
    %1756 = vmatpush.bf16.xpose.msra.mxu0 0
    %1757 = vmatpush.bf16.xpose.msra.mxu0 0
    %1758 = vmatpush.bf16.xpose.msra.mxu0 0
    %1759 = vmatpush.bf16.xpose.msra.mxu0 0
    %1760 = vmatpush.bf16.xpose.msra.mxu0 0
    %1761 = vmatpush.bf16.xpose.msra.mxu0 %v1752
    %1762 = vmatmul.bf16.gmra.mxu0 %v1749
    %v1763 = vpop.f32.mrf.mxu0
    %v1764 = vadd.f32 0.0, %v1763
    %v1765 = vpop.f32.mrf.mxu0
    %1766 = vdwg.mxu0
    %v1768 = vunpack.c.l.b16 %v1735
    %v1769 = vpack.c.b16 %v1768, %v1768
    %1770 = vrot.lane.b32.xlu0 %v1769, 104
    %v1771 = vpop.permute.xlu0 %1770
    %v1773 = vunpack.c.l.b16 %v1737
    %v1774 = vpack.c.b16 %v1773, %v1773
    %1775 = vrot.lane.b32.xlu0 %v1774, 72
    %v1776 = vpop.permute.xlu0 %1775
    %v1778 = vsel %vm128, %v1771, 0
    %v1781 = vsel %vm128, %v1776, 0
    %1783 = vmatpush.bf16.xpose.msra.mxu0 0
    %1784 = vmatpush.bf16.xpose.msra.mxu0 0
    %1785 = vmatpush.bf16.xpose.msra.mxu0 0
    %1786 = vmatpush.bf16.xpose.msra.mxu0 0
    %1787 = vmatpush.bf16.xpose.msra.mxu0 0
    %1788 = vmatpush.bf16.xpose.msra.mxu0 0
    %1789 = vmatpush.bf16.xpose.msra.mxu0 0
    %1790 = vmatpush.bf16.xpose.msra.mxu0 %v1781
    %1791 = vmatmul.bf16.gmra.mxu0 %v1778
    %v1792 = vpop.f32.mrf.mxu0
    %v1793 = vadd.f32 0.0, %v1792
    %v1794 = vpop.f32.mrf.mxu0
    %1795 = vdwg.mxu0
    %v1796 = vmul.f32 %v1632, 0.35355338
    %v1797 = vmul.f32 %v1633, 0.35355338
    %v1798 = vmul.f32 %v1764, %v1796
    %v1799 = vmul.f32 %v1793, %v1797
    %1800 = vxpose.xlu0.b32.start [1/16] %v1681, 128
    %1801 = vxpose.xlu0.b32.cont [2/16] 0.0, 128
    %1802 = vxpose.xlu0.b32.cont [3/16] 0.0, 128
    %1803 = vxpose.xlu0.b32.cont [4/16] 0.0, 128
    %1804 = vxpose.xlu0.b32.cont [5/16] 0.0, 128
    %1805 = vxpose.xlu0.b32.cont [6/16] 0.0, 128
    %1806 = vxpose.xlu0.b32.cont [7/16] 0.0, 128
    %1807 = vxpose.xlu0.b32.cont [8/16] 0.0, 128
    %1808 = vxpose.xlu0.b32.cont [9/16] 0.0, 128
    %1809 = vxpose.xlu0.b32.cont [10/16] 0.0, 128
    %1810 = vxpose.xlu0.b32.cont [11/16] 0.0, 128
    %1811 = vxpose.xlu0.b32.cont [12/16] 0.0, 128
    %1812 = vxpose.xlu0.b32.cont [13/16] 0.0, 128
    %1813 = vxpose.xlu0.b32.cont [14/16] 0.0, 128
    %1814 = vxpose.xlu0.b32.cont [15/16] 0.0, 128
    %1815 = vxpose.xlu0.b32.end [16/16] 0.0, 128
    %v1816 = vpop.trf.xlu0
    %v1817 = vpop.trf.xlu0
    %v1818 = vpop.trf.xlu0
    %v1819 = vpop.trf.xlu0
    %v1820 = vpop.trf.xlu0
    %v1821 = vpop.trf.xlu0
    %v1822 = vpop.trf.xlu0
    %v1823 = vpop.trf.xlu0
    %v1824 = vpop.trf.xlu0
    %v1825 = vpop.trf.xlu0
    %v1826 = vpop.trf.xlu0
    %v1827 = vpop.trf.xlu0
    %v1828 = vpop.trf.xlu0
    %v1829 = vpop.trf.xlu0
    %v1830 = vpop.trf.xlu0
    %v1831 = vpop.trf.xlu0
    %1832 = vxpose.xlu0.b32.start [1/16] %v1682, 128
    %1833 = vxpose.xlu0.b32.cont [2/16] 0.0, 128
    %1834 = vxpose.xlu0.b32.cont [3/16] 0.0, 128
    %1835 = vxpose.xlu0.b32.cont [4/16] 0.0, 128
    %1836 = vxpose.xlu0.b32.cont [5/16] 0.0, 128
    %1837 = vxpose.xlu0.b32.cont [6/16] 0.0, 128
    %1838 = vxpose.xlu0.b32.cont [7/16] 0.0, 128
    %1839 = vxpose.xlu0.b32.cont [8/16] 0.0, 128
    %1840 = vxpose.xlu0.b32.cont [9/16] 0.0, 128
    %1841 = vxpose.xlu0.b32.cont [10/16] 0.0, 128
    %1842 = vxpose.xlu0.b32.cont [11/16] 0.0, 128
    %1843 = vxpose.xlu0.b32.cont [12/16] 0.0, 128
    %1844 = vxpose.xlu0.b32.cont [13/16] 0.0, 128
    %1845 = vxpose.xlu0.b32.cont [14/16] 0.0, 128
    %1846 = vxpose.xlu0.b32.cont [15/16] 0.0, 128
    %1847 = vxpose.xlu0.b32.end [16/16] 0.0, 128
    %v1848 = vpop.trf.xlu0
    %v1849 = vpop.trf.xlu0
    %v1850 = vpop.trf.xlu0
    %v1851 = vpop.trf.xlu0
    %v1852 = vpop.trf.xlu0
    %v1853 = vpop.trf.xlu0
    %v1854 = vpop.trf.xlu0
    %v1855 = vpop.trf.xlu0
    %v1856 = vpop.trf.xlu0
    %v1857 = vpop.trf.xlu0
    %v1858 = vpop.trf.xlu0
    %v1859 = vpop.trf.xlu0
    %v1860 = vpop.trf.xlu0
    %v1861 = vpop.trf.xlu0
    %v1862 = vpop.trf.xlu0
    %v1863 = vpop.trf.xlu0
    %v1864 = vperm.slane %v1816, 0
    %v1865 = vperm.slane %v1848, 0
    %v1866 = vmul.f32 %v1798, %v1864
    %v1867 = vmul.f32 %v1799, %v1865
    %v1868 = vsel %vm128, %v1866, -inf
    %1869 = vmax.xlane.f32.xlu0 %v1868
    %v1870 = vpop.xlane.xlu0 %1869
    %v1871 = vsel %vm128, %v1867, -inf
    %1872 = vmax.xlane.f32.xlu0 %v1871
    %v1873 = vpop.xlane.xlu0 %1872
    %v1874 = vsub.f32 %v1866, %v1870
    %v1875 = vsub.f32 %v1867, %v1873
    %v1876 = vmul.f32 %v1874, 1.442695
    %v1877 = vpow.pop %v1876
    %v1878 = vmul.f32 %v1875, 1.442695
    %v1879 = vpow.pop %v1878
    %v1880 = vsel %vm128, %v1877, 0.0
    %1881 = vadd.xlane.f32.xlu0 %v1880
    %v1882 = vpop.xlane.xlu0 %1881
    %v1883 = vsel %vm128, %v1879, 0.0
    %1884 = vadd.xlane.f32.xlu0 %v1883
    %v1885 = vpop.xlane.xlu0 %1884
    %v1886 = vrcp.pop %v1882
    %v1887 = vmul.f32 %v1882, %v1886
    %v1888 = vsub.f32 1.0, %v1887
    %v1889 = vmul.f32 %v1886, %v1888
    %v1890 = vadd.f32 %v1886, %v1889
    %vm1891 = vweird.f32 %v1882
    %vm1892 = vweird.f32 %v1886
    %vm1893 = vmor %vm1891, %vm1892
    %v1894 = vsel %vm1893, %v1886, %v1890
    %v1895 = vand.u32 2147483647, %v1882
    %vm1896 = vcmp.eq.f32.partialorder %v1895, 8.507059e+37
    %v1897 = vand.u32 %v1882, 2147483648
    %v1898 = vor.u32 1.1754944e-38, %v1897
    %v1899 = vsel %vm1896, %v1898, %v1894
    %v1900 = vmul.f32 %v1877, %v1899
    %v1901 = vrcp.pop %v1885
    %v1902 = vmul.f32 %v1885, %v1901
    %v1903 = vsub.f32 1.0, %v1902
    %v1904 = vmul.f32 %v1901, %v1903
    %v1905 = vadd.f32 %v1901, %v1904
    %vm1906 = vweird.f32 %v1885
    %vm1907 = vweird.f32 %v1901
    %vm1908 = vmor %vm1906, %vm1907
    %v1909 = vsel %vm1908, %v1901, %v1905
    %v1910 = vand.u32 2147483647, %v1885
    %vm1911 = vcmp.eq.f32.partialorder %v1910, 8.507059e+37
    %v1912 = vand.u32 %v1885, 2147483648
    %v1913 = vor.u32 1.1754944e-38, %v1912
    %v1914 = vsel %vm1911, %v1913, %v1909
    %v1915 = vmul.f32 %v1879, %v1914
    %v1916 = vand.u32 2147483647, %v1900
    %v1917 = vand.u32 2147483647, %v1915
    %v1918 = vsel %vm128, %v1916, -inf
    %1919 = vmax.xlane.f32.xlu0 %v1918
    %v1920 = vpop.xlane.xlu0 %1919
    %v1921 = vsel %vm128, %v1917, -inf
    %1922 = vmax.xlane.f32.xlu0 %v1921
    %v1923 = vpop.xlane.xlu0 %1922
    %v1924 = vmax.f32 %v1920, 1e-05
    %v1925 = vmax.f32 %v1923, 1e-05
    %v1926 = vrcp.pop %v1924
    %v1927 = vmul.f32 %v1924, %v1926
    %v1928 = vsub.f32 1.0, %v1927
    %v1929 = vmul.f32 %v1926, %v1928
    %v1930 = vadd.f32 %v1926, %v1929
    %vm1931 = vweird.f32 %v1924
    %vm1932 = vweird.f32 %v1926
    %vm1933 = vmor %vm1931, %vm1932
    %v1934 = vsel %vm1933, %v1926, %v1930
    %v1935 = vand.u32 2147483647, %v1924
    %vm1936 = vcmp.eq.f32.partialorder %v1935, 8.507059e+37
    %v1937 = vand.u32 %v1924, 2147483648
    %v1938 = vor.u32 1.1754944e-38, %v1937
    %v1939 = vsel %vm1936, %v1938, %v1934
    %v1940 = vmul.f32 127.0, %v1939
    %v1941 = vrcp.pop %v1925
    %v1942 = vmul.f32 %v1925, %v1941
    %v1943 = vsub.f32 1.0, %v1942
    %v1944 = vmul.f32 %v1941, %v1943
    %v1945 = vadd.f32 %v1941, %v1944
    %vm1946 = vweird.f32 %v1925
    %vm1947 = vweird.f32 %v1941
    %vm1948 = vmor %vm1946, %vm1947
    %v1949 = vsel %vm1948, %v1941, %v1945
    %v1950 = vand.u32 2147483647, %v1925
    %vm1951 = vcmp.eq.f32.partialorder %v1950, 8.507059e+37
    %v1952 = vand.u32 %v1925, 2147483648
    %v1953 = vor.u32 1.1754944e-38, %v1952
    %v1954 = vsel %vm1951, %v1953, %v1949
    %v1955 = vmul.f32 127.0, %v1954
    %v1956 = vmul.f32 %v1900, %v1940
    %v1957 = vmul.f32 %v1915, %v1955
    %v1958 = vround.ne.pseudo %v1956
    %v1959 = vround.ne.pseudo %v1957
    %v1960 = vmax.f32 %v1958, -128.0
    %v1961 = vmax.f32 %v1959, -128.0
    %v1962 = vmin.f32 %v1960, 127.0
    %v1963 = vmin.f32 %v1961, 127.0
    %v1964 = vmul.f32 %v1924, 0.007874016
    %v1965 = vmul.f32 %v1925, 0.007874016
    %v1966 = vmul.f32 %v1962, %v1964
    %v1967 = vmul.f32 %v1963, %v1965
    %1969 = vrot.lane.b32.xlu0 %v1732, 40
    %v1970 = vpop.permute.xlu0 %1969
    %v1973 = vsel %vm128, %v1966, 0
    %1975 = vmatpush.msra.mxu0 0.0
    %1976 = vmatpush.msra.mxu0 0.0
    %1977 = vmatpush.msra.mxu0 0.0
    %1978 = vmatpush.msra.mxu0 0.0
    %1979 = vmatpush.msra.mxu0 0.0
    %1980 = vmatpush.msra.mxu0 0.0
    %1981 = vmatpush.msra.mxu0 0.0
    %1982 = vmatpush.msra.mxu0 0.0
    %1983 = vmatpush.msra.mxu0 0.0
    %1984 = vmatpush.msra.mxu0 0.0
    %1985 = vmatpush.msra.mxu0 0.0
    %1986 = vmatpush.msra.mxu0 0.0
    %1987 = vmatpush.msra.mxu0 0.0
    %1988 = vmatpush.msra.mxu0 0.0
    %1989 = vmatpush.msra.mxu0 0.0
    %1990 = vmatpush.msra.mxu0 %v1970
    %1991 = vmatmul.f32.gmra.mxu0 %v1973
    %v1992 = vpop.f32.mrf.mxu0
    %v1993 = vadd.f32 0.0, %v1992
    %1994 = vdwg.mxu0
    %1996 = vrot.lane.b32.xlu0 %v1733, 40
    %v1997 = vpop.permute.xlu0 %1996
    %v2000 = vsel %vm128, %v1967, 0
    %2002 = vmatpush.msra.mxu0 0.0
    %2003 = vmatpush.msra.mxu0 0.0
    %2004 = vmatpush.msra.mxu0 0.0
    %2005 = vmatpush.msra.mxu0 0.0
    %2006 = vmatpush.msra.mxu0 0.0
    %2007 = vmatpush.msra.mxu0 0.0
    %2008 = vmatpush.msra.mxu0 0.0
    %2009 = vmatpush.msra.mxu0 0.0
    %2010 = vmatpush.msra.mxu0 0.0
    %2011 = vmatpush.msra.mxu0 0.0
    %2012 = vmatpush.msra.mxu0 0.0
    %2013 = vmatpush.msra.mxu0 0.0
    %2014 = vmatpush.msra.mxu0 0.0
    %2015 = vmatpush.msra.mxu0 0.0
    %2016 = vmatpush.msra.mxu0 0.0
    %2017 = vmatpush.msra.mxu0 %v1997
    %2018 = vmatmul.f32.gmra.mxu0 %v2000
    %v2019 = vpop.f32.mrf.mxu0
    %v2020 = vadd.f32 0.0, %v2019
    %2021 = vdwg.mxu0
    %v2022 = vand.u32 2147483647, %v1993
    %v2023 = vand.u32 2147483647, %v2020
    %v2024 = vsel %vm128, %v2022, -inf
    %2025 = vmax.xlane.f32.xlu0 %v2024
    %v2026 = vpop.xlane.xlu0 %2025
    %v2027 = vsel %vm128, %v2023, -inf
    %2028 = vmax.xlane.f32.xlu0 %v2027
    %v2029 = vpop.xlane.xlu0 %2028
    %v2030 = vmax.f32 %v2026, 1e-05
    %v2031 = vmax.f32 %v2029, 1e-05
    %v2032 = vrcp.pop %v2030
    %v2033 = vmul.f32 %v2030, %v2032
    %v2034 = vsub.f32 1.0, %v2033
    %v2035 = vmul.f32 %v2032, %v2034
    %v2036 = vadd.f32 %v2032, %v2035
    %vm2037 = vweird.f32 %v2030
    %vm2038 = vweird.f32 %v2032
    %vm2039 = vmor %vm2037, %vm2038
    %v2040 = vsel %vm2039, %v2032, %v2036
    %v2041 = vand.u32 2147483647, %v2030
    %vm2042 = vcmp.eq.f32.partialorder %v2041, 8.507059e+37
    %v2043 = vand.u32 %v2030, 2147483648
    %v2044 = vor.u32 1.1754944e-38, %v2043
    %v2045 = vsel %vm2042, %v2044, %v2040
    %v2046 = vmul.f32 127.0, %v2045
    %v2047 = vrcp.pop %v2031
    %v2048 = vmul.f32 %v2031, %v2047
    %v2049 = vsub.f32 1.0, %v2048
    %v2050 = vmul.f32 %v2047, %v2049
    %v2051 = vadd.f32 %v2047, %v2050
    %vm2052 = vweird.f32 %v2031
    %vm2053 = vweird.f32 %v2047
    %vm2054 = vmor %vm2052, %vm2053
    %v2055 = vsel %vm2054, %v2047, %v2051
    %v2056 = vand.u32 2147483647, %v2031
    %vm2057 = vcmp.eq.f32.partialorder %v2056, 8.507059e+37
    %v2058 = vand.u32 %v2031, 2147483648
    %v2059 = vor.u32 1.1754944e-38, %v2058
    %v2060 = vsel %vm2057, %v2059, %v2055
    %v2061 = vmul.f32 127.0, %v2060
    %v2062 = vmul.f32 %v1993, %v2046
    %v2063 = vmul.f32 %v2020, %v2061
    %v2064 = vround.ne.pseudo %v2062
    %v2065 = vround.ne.pseudo %v2063
    %v2066 = vmax.f32 %v2064, -128.0
    %v2067 = vmax.f32 %v2065, -128.0
    %v2068 = vmin.f32 %v2066, 127.0
    %v2069 = vmin.f32 %v2067, 127.0
    %v2070 = vmul.f32 %v2030, 0.007874016
    %v2071 = vmul.f32 %v2031, 0.007874016
    %v2072 = vmul.f32 %v2068, %v2070
    %v2073 = vmul.f32 %v2069, %v2071
    %2076 = vrot.lane.b32.xlu0 %v1094, 8
    %v2077 = vpop.permute.xlu0 %2076
    %2078 = vrot.lane.b32.xlu0 %v1095, 8
    %v2079 = vpop.permute.xlu0 %2078
    %2084 = vrot.lane.b32.xlu0 %v1583, 16
    %v2085 = vpop.permute.xlu0 %2084
    %2086 = vrot.lane.b32.xlu0 %v1584, 16
    %v2087 = vpop.permute.xlu0 %2086
    %2092 = vrot.lane.b32.xlu0 %v2072, 24
    %v2093 = vpop.permute.xlu0 %2092
    %2094 = vrot.lane.b32.xlu0 %v2073, 24
    %v2095 = vpop.permute.xlu0 %2094
    %v2098 = vsel %vm128, %v605, %v2077
    %v2099 = vsel %vm128, %v606, %v2079
    %vm2100 = vcmask 130048
    %v2101 = vsel %vm2100, %v2098, %v2085
    %v2102 = vsel %vm2100, %v2099, %v2087
    %vm2103 = vcmask 195584
    %v2104 = vsel %vm2103, %v2101, %v2093
    %v2105 = vsel %vm2103, %v2102, %v2095
    %v2106 = vld [vmem:[%s4] sm:$0xff]
    %v2107 = vld [vmem:[%s4 + $0x8] sm:$0xff]
    %v2108 = vld [vmem:[%s4 + $0x10] sm:$0xff]
    %v2109 = vld [vmem:[%s4 + $0x18] sm:$0xff]
    %v2110 = vld [vmem:[%s5] sm:$0x1]
    %v2112 = vperm.slane %v2110, 0
    %v2115 = vsel %vm29, %v2104, 0
    %v2118 = vsel %vm29, %v2105, 0
    %2120 = vmatpush.msra.mxu0 0.0
    %2121 = vmatpush.msra.mxu0 0.0
    %2122 = vmatpush.msra.mxu0 0.0
    %2123 = vmatpush.msra.mxu0 0.0
    %2124 = vmatpush.msra.mxu0 0.0
    %2125 = vmatpush.msra.mxu0 0.0
    %2126 = vmatpush.msra.mxu0 0.0
    %2127 = vmatpush.msra.mxu0 0.0
    %2128 = vmatpush.msra.mxu0 0.0
    %2129 = vmatpush.msra.mxu0 0.0
    %2130 = vmatpush.msra.mxu0 0.0
    %2131 = vmatpush.msra.mxu0 0.0
    %2132 = vmatpush.msra.mxu0 %v2109
    %2133 = vmatpush.msra.mxu0 %v2108
    %2134 = vmatpush.msra.mxu0 %v2107
    %2135 = vmatpush.msra.mxu0 %v2106
    %2136 = vmatmul.f32.gmra.mxu0 %v2115
    %v2137 = vpop.f32.mrf.mxu0
    %v2138 = vadd.f32 %v2112, %v2137
    %2139 = vmatmul.f32.gmra.mxu0 %v2118
    %v2140 = vpop.f32.mrf.mxu0
    %v2141 = vadd.f32 %v2112, %v2140
    %2142 = vdwg.mxu0
    %v2143 = vand.u32 2147483647, %v2138
    %v2144 = vand.u32 2147483647, %v2141
    %v2145 = vsel %vm29, %v2143, -inf
    %2146 = vmax.xlane.f32.xlu0 %v2145
    %v2147 = vpop.xlane.xlu0 %2146
    %v2148 = vsel %vm29, %v2144, -inf
    %2149 = vmax.xlane.f32.xlu0 %v2148
    %v2150 = vpop.xlane.xlu0 %2149
    %v2151 = vmax.f32 %v2147, 1e-05
    %v2152 = vmax.f32 %v2150, 1e-05
    %v2153 = vrcp.pop %v2151
    %v2154 = vmul.f32 %v2151, %v2153
    %v2155 = vsub.f32 1.0, %v2154
    %v2156 = vmul.f32 %v2153, %v2155
    %v2157 = vadd.f32 %v2153, %v2156
    %vm2158 = vweird.f32 %v2151
    %vm2159 = vweird.f32 %v2153
    %vm2160 = vmor %vm2158, %vm2159
    %v2161 = vsel %vm2160, %v2153, %v2157
    %v2162 = vand.u32 2147483647, %v2151
    %vm2163 = vcmp.eq.f32.partialorder %v2162, 8.507059e+37
    %v2164 = vand.u32 %v2151, 2147483648
    %v2165 = vor.u32 1.1754944e-38, %v2164
    %v2166 = vsel %vm2163, %v2165, %v2161
    %v2167 = vmul.f32 127.0, %v2166
    %v2168 = vrcp.pop %v2152
    %v2169 = vmul.f32 %v2152, %v2168
    %v2170 = vsub.f32 1.0, %v2169
    %v2171 = vmul.f32 %v2168, %v2170
    %v2172 = vadd.f32 %v2168, %v2171
    %vm2173 = vweird.f32 %v2152
    %vm2174 = vweird.f32 %v2168
    %vm2175 = vmor %vm2173, %vm2174
    %v2176 = vsel %vm2175, %v2168, %v2172
    %v2177 = vand.u32 2147483647, %v2152
    %vm2178 = vcmp.eq.f32.partialorder %v2177, 8.507059e+37
    %v2179 = vand.u32 %v2152, 2147483648
    %v2180 = vor.u32 1.1754944e-38, %v2179
    %v2181 = vsel %vm2178, %v2180, %v2176
    %v2182 = vmul.f32 127.0, %v2181
    %v2183 = vmul.f32 %v2138, %v2167
    %v2184 = vmul.f32 %v2141, %v2182
    %v2185 = vround.ne.pseudo %v2183
    %v2186 = vround.ne.pseudo %v2184
    %v2187 = vmax.f32 %v2185, -128.0
    %v2188 = vmax.f32 %v2186, -128.0
    %v2189 = vmin.f32 %v2187, 127.0
    %v2190 = vmin.f32 %v2188, 127.0
    %v2191 = vmul.f32 %v2151, 0.007874016
    %v2192 = vmul.f32 %v2152, 0.007874016
    %v2193 = vmul.f32 %v2189, %v2191
    %v2194 = vmul.f32 %v2190, %v2192
    %2195 = vst.msk [vmem:[#allocation2] sm:$0xff] %vm29, %v2193
    %2196 = vst.msk [vmem:[#allocation2 + $0x8] sm:$0xff] %vm29, %v2194
    // Predicated region
    $region26: #{gain_cell_attention.1} parent=1 // pred_check
      _
    $region27: #{gain_cell_attention.1} parent=1 // pred_check_branch
      %2198 = sbr.rel (0) target = $region29
    $region28: #{gain_cell_attention.1} parent=1 // pred_region
      %2200 = vsyncadd [#allocation3], 0
      %s2201 = sshll.u32 [#allocation2], 4
      %s2202 = int_to_ptr.vmem [resolvable:$true] %s2201
      %s2203 = sshll.u32 %s6, 4
      %s2204 = int_to_ptr.hbm [resolvable:$true] %s2203
      %2209 = dma.vmem_to_hbm [thread:$0]  %s2202, 256, %s2204, [#allocation3], 128, 128, 8
    $region29: #{gain_cell_attention.1} parent=1 // pred_fallthru
      _
    // Predicated region
    $region30: #{gain_cell_attention.1} parent=1 // pred_check
      _
    $region31: #{gain_cell_attention.1} parent=1 // pred_check_branch
      %2211 = sbr.rel (0) target = $region33
    $region32: #{gain_cell_attention.1} parent=1 // pred_region
      %2213 = dma.done [#allocation3], 256
    $region33: #{gain_cell_attention.1} parent=1 // pred_fallthru
      _
    %2214 = vsyncpa [#allocation3], 1

</llo_original>
